<compile_context>
chip_gen: v7x
topology: tpu7x:2x2x1
jax: 0.10.0
libtpu: 0.0.40
codegen_flags: <defaults>
</compile_context>

<pallas_src>
import math

import jax
import jax.numpy as jnp
from jax import lax
from jax.experimental import pallas as pl
from jax.experimental.pallas import tpu as pltpu

# ---------------------------------------------------------------------------
# Model hyper-parameters (small, deterministic demo sizes)
# ---------------------------------------------------------------------------
BATCH = 2
SEQ = 8
D_MODEL = 32
NUM_HEADS = 4
D_FF = 64
D_K = D_MODEL // NUM_HEADS
LN_EPS = 1e-5  # PyTorch nn.LayerNorm default


def _layer_norm(v, gamma, beta):
    # v: (N, D); gamma/beta: (1, D).  Biased variance, like torch.nn.LayerNorm.
    mu = jnp.mean(v, axis=-1, keepdims=True)
    var = jnp.mean((v - mu) ** 2, axis=-1, keepdims=True)
    return (v - mu) * lax.rsqrt(var + LN_EPS) * gamma + beta


def encoder_layer_kernel(
    x_ref,        # (SEQ, D)     bf16, one sequence per grid step
    wqkv_ref,     # (D, 3D)      bf16, fused Q|K|V weight (Q cols pre-scaled)
    bqkv_ref,     # (1, 3D)      f32,  fused Q|K|V bias   (Q part pre-scaled)
    wo_ref,       # (D, D)       bf16
    w1_ref,       # (D, D_FF)    bf16
    w2_ref,       # (D_FF, D)    bf16
    vec_ref,      # (8, D_FF)    f32 packed small vectors (b1,bo,b2,g1,be1,g2,be2)
    out_ref,      # (SEQ, D)     f32
):
    x16 = x_ref[...]                       # (S, D) bf16 (matmul operand)
    xf = x16.astype(jnp.float32)           # f32 residual trunk

    # Unpack small parameter vectors (static sublane/lane slices of one tile).
    b1 = vec_ref[0:1, :]                   # (1, D_FF)
    bo = vec_ref[1:2, :D_MODEL]            # (1, D)
    b2 = vec_ref[2:3, :D_MODEL]
    g1 = vec_ref[3:4, :D_MODEL]
    be1 = vec_ref[4:5, :D_MODEL]
    g2 = vec_ref[5:6, :D_MODEL]
    be2 = vec_ref[6:7, :D_MODEL]

    # ---- Fused Q/K/V projection: one (S, D) @ (D, 3D) bf16 MXU push ----
    qkv = jnp.dot(x16, wqkv_ref[...],
                  preferred_element_type=jnp.float32) + bqkv_ref[...]   # (S, 3D) f32

    # ---- Head-batched Q/K/V: (H, S, D_K); qkv sliced exactly once per
    #      (tensor, head) — no double lane-offset re-slicing.
    def head_stack(base):
        return jnp.stack(
            [qkv[:, base + h * D_K: base + (h + 1) * D_K] for h in range(NUM_HEADS)],
            axis=0)

    q_h = head_stack(0)                    # (H, S, D_K), already scaled by 1/sqrt(d_k)
    k_h = head_stack(D_MODEL)
    v_h = head_stack(2 * D_MODEL)

    # ---- Attention scores for ALL heads in one batched dot_general ----
    scores = jnp.einsum(
        "hqd,hkd->hqk",
        q_h.astype(jnp.bfloat16), k_h.astype(jnp.bfloat16),
        preferred_element_type=jnp.float32)                              # (H, S, S)
    # TODO(synk): optional attention mask (mask=None in this forward) not implemented

    # numerically-stable softmax along keys, statistics in f32, exact divide
    scores = scores - jnp.max(scores, axis=-1, keepdims=True)
    p = jnp.exp(scores)
    p = p / jnp.sum(p, axis=-1, keepdims=True)

    # ---- P @ V for all heads in one batched dot_general ----
    ctx = jnp.einsum(
        "hqk,hkd->hqd",
        p.astype(jnp.bfloat16), v_h.astype(jnp.bfloat16),
        preferred_element_type=jnp.float32)                              # (H, S, D_K)

    # heads -> (S, D) lane concat, then ONE full output projection with Wo
    attn = jnp.concatenate([ctx[h] for h in range(NUM_HEADS)], axis=-1)  # (S, D) f32
    attn_out = jnp.dot(attn.astype(jnp.bfloat16), wo_ref[...],
                       preferred_element_type=jnp.float32) + bo

    # ---- Add & Norm 1 (dropout is identity in eval mode) ----
    r1 = _layer_norm(xf + attn_out, g1, be1)

    # ---- Position-wise feed-forward (bf16 matmul inputs, f32 accumulate) ----
    h1 = jnp.maximum(
        jnp.dot(r1.astype(jnp.bfloat16), w1_ref[...],
                preferred_element_type=jnp.float32) + b1, 0.0)
    ff = jnp.dot(h1.astype(jnp.bfloat16), w2_ref[...],
                 preferred_element_type=jnp.float32) + b2

    # ---- Add & Norm 2 ----
    out_ref[...] = _layer_norm(r1 + ff, g2, be2).astype(out_ref.dtype)


def transformer_encoder_layer(x, params):
    """x: (B, S, D) float32.  params: dict of weights (see init_params)."""
    B, S, D = x.shape
    assert (B, S, D) == (BATCH, SEQ, D_MODEL)
    x2d = x.reshape(B * S, D).astype(jnp.bfloat16)

    # Host-side packing: fused QKV weight/bias with 1/sqrt(d_k) folded into the
    # Q columns, weights cast to bf16, small vectors packed into one slab.
    scale = 1.0 / math.sqrt(D_K)
    wqkv = jnp.concatenate(
        [params["wq"] * scale, params["wk"], params["wv"]], axis=1).astype(jnp.bfloat16)
    bqkv = jnp.concatenate(
        [params["bq"] * scale, params["bk"], params["bv"]], axis=1)        # (1, 3D) f32

    vec_pack = jnp.zeros((8, D_FF), jnp.float32)
    vec_pack = vec_pack.at[0, :D_FF].set(params["b1"][0])
    vec_pack = vec_pack.at[1, :D_MODEL].set(params["bo"][0])
    vec_pack = vec_pack.at[2, :D_MODEL].set(params["b2"][0])
    vec_pack = vec_pack.at[3, :D_MODEL].set(params["g1"][0])
    vec_pack = vec_pack.at[4, :D_MODEL].set(params["be1"][0])
    vec_pack = vec_pack.at[5, :D_MODEL].set(params["g2"][0])
    vec_pack = vec_pack.at[6, :D_MODEL].set(params["be2"][0])

    wo = params["wo"].astype(jnp.bfloat16)
    w1 = params["w1"].astype(jnp.bfloat16)
    w2 = params["w2"].astype(jnp.bfloat16)

    # Grid over sequences: parallel axis -> both v7x TensorCores at scale and
    # activation/output double-buffering; weights stay resident via constant
    # index_maps.  (At larger B*S, keep this row axis a multiple of 8 rows.)
    # TODO(synk): lane-dense (N/4, 128) output repack skipped — marginal at D=32.
    out2d = pl.pallas_call(
        encoder_layer_kernel,
        out_shape=jax.ShapeDtypeStruct((B * S, D), jnp.float32),
        grid=(B,),
        in_specs=[
            pl.BlockSpec((SEQ, D_MODEL), lambda b: (b, 0)),           # x (per-sequence)
            pl.BlockSpec((D_MODEL, 3 * D_MODEL), lambda b: (0, 0)),   # wqkv
            pl.BlockSpec((1, 3 * D_MODEL), lambda b: (0, 0)),         # bqkv
            pl.BlockSpec((D_MODEL, D_MODEL), lambda b: (0, 0)),       # wo
            pl.BlockSpec((D_MODEL, D_FF), lambda b: (0, 0)),          # w1
            pl.BlockSpec((D_FF, D_MODEL), lambda b: (0, 0)),          # w2
            pl.BlockSpec((8, D_FF), lambda b: (0, 0)),                # vec pack
        ],
        out_specs=pl.BlockSpec((SEQ, D_MODEL), lambda b: (b, 0)),
        compiler_params=pltpu.CompilerParams(
            dimension_semantics=("parallel",),
            vmem_limit_bytes=32 * 1024 * 1024,
        ),
    )(x2d, wqkv, bqkv, wo, w1, w2, vec_pack)
    return out2d.reshape(B, S, D)


def init_params(key):
    """Deterministic synthetic parameters matching the nn.Module shapes.
    Linear weights stored as [in, out]; biases/LN params stored as [1, dim]."""
    keys = jax.random.split(key, 12)
    scale = 0.05

    def lin(k, din, dout):
        return scale * jax.random.normal(k, (din, dout), jnp.float32)

    def bias(k, dout):
        return scale * jax.random.normal(k, (1, dout), jnp.float32)

    params = {
        "wq": lin(keys[0], D_MODEL, D_MODEL), "bq": bias(keys[1], D_MODEL),
        "wk": lin(keys[2], D_MODEL, D_MODEL), "bk": bias(keys[3], D_MODEL),
        "wv": lin(keys[4], D_MODEL, D_MODEL), "bv": bias(keys[5], D_MODEL),
        "wo": lin(keys[6], D_MODEL, D_MODEL), "bo": bias(keys[7], D_MODEL),
        "w1": lin(keys[8], D_MODEL, D_FF),    "b1": bias(keys[9], D_FF),
        "w2": lin(keys[10], D_FF, D_MODEL),   "b2": bias(keys[11], D_MODEL),
        # LayerNorm affine params: fresh nn.LayerNorm init (ones / zeros)
        "g1": jnp.ones((1, D_MODEL), jnp.float32),
        "be1": jnp.zeros((1, D_MODEL), jnp.float32),
        "g2": jnp.ones((1, D_MODEL), jnp.float32),
        "be2": jnp.zeros((1, D_MODEL), jnp.float32),
    }
    return params


def reference_forward(x, params):
    """Pure-JAX f32 reference of the same forward pass (for sanity checking)."""
    def ln(v, g, b):
        mu = jnp.mean(v, axis=-1, keepdims=True)
        var = jnp.mean((v - mu) ** 2, axis=-1, keepdims=True)
        return (v - mu) / jnp.sqrt(var + LN_EPS) * g + b

    B, S, D = x.shape
    q = x @ params["wq"] + params["bq"]
    k = x @ params["wk"] + params["bk"]
    v = x @ params["wv"] + params["bv"]
    q = q.reshape(B, S, NUM_HEADS, D_K).transpose(0, 2, 1, 3)
    k = k.reshape(B, S, NUM_HEADS, D_K).transpose(0, 2, 1, 3)
    v = v.reshape(B, S, NUM_HEADS, D_K).transpose(0, 2, 1, 3)
    scores = jnp.einsum("bhqd,bhkd->bhqk", q, k) / math.sqrt(D_K)
    p = jax.nn.softmax(scores, axis=-1)
    o = jnp.einsum("bhqk,bhkd->bhqd", p, v).transpose(0, 2, 1, 3).reshape(B, S, D)
    attn = o @ params["wo"] + params["bo"]
    r1 = ln(x + attn, params["g1"], params["be1"])
    ff = jnp.maximum(r1 @ params["w1"] + params["b1"], 0.0) @ params["w2"] + params["b2"]
    return ln(r1 + ff, params["g2"], params["be2"])


if __name__ == "__main__":
    key = jax.random.PRNGKey(0)
    k_x, k_p = jax.random.split(key)
    x = jax.random.normal(k_x, (BATCH, SEQ, D_MODEL), jnp.float32)
    params = init_params(k_p)

    out = transformer_encoder_layer(x, params)
    out = jax.block_until_ready(out)

    ref = reference_forward(x, params)
    assert out.shape == (BATCH, SEQ, D_MODEL)
    # Tolerance reflects bf16 matmul inputs (activations + weights) vs the f32
    # reference; all accumulation and LayerNorm/softmax statistics are f32.
    assert jnp.allclose(out, ref, atol=3e-2, rtol=3e-2), (
        f"max abs err = {jnp.max(jnp.abs(out - ref))}"
    )
    print("KERNEL_OK")
</pallas_src>

<mosaic_0001>
module attributes {stable_mosaic.version = 11 : i64} {
  func.func @encoder_layer_kernel(%arg0: i32, %arg1: memref<8x32xbf16, #tpu.memory_space<vmem>>, %arg2: memref<32x96xbf16, #tpu.memory_space<vmem>>, %arg3: memref<1x96xf32, #tpu.memory_space<vmem>>, %arg4: memref<32x32xbf16, #tpu.memory_space<vmem>>, %arg5: memref<32x64xbf16, #tpu.memory_space<vmem>>, %arg6: memref<64x32xbf16, #tpu.memory_space<vmem>>, %arg7: memref<8x64xf32, #tpu.memory_space<vmem>>, %arg8: memref<8x32xf32, #tpu.memory_space<vmem>>) attributes {dimension_semantics = [#tpu.dimension_semantics<parallel>], iteration_bounds = array<i64: 2>, scalar_prefetch = 0 : i64, scratch_operands = 0 : i64, tpu.core_type = #tpu.core_type<tc>, window_params = [{transform_indices = @transform_0, window_bounds = array<i64: 8, 32>}, {pipeline_mode = #tpu.pipeline_mode<synchronous>, transform_indices = @transform_1, window_bounds = array<i64: 32, 96>}, {pipeline_mode = #tpu.pipeline_mode<synchronous>, transform_indices = @transform_2, window_bounds = array<i64: 1, 96>}, {pipeline_mode = #tpu.pipeline_mode<synchronous>, transform_indices = @transform_3, window_bounds = array<i64: 32, 32>}, {pipeline_mode = #tpu.pipeline_mode<synchronous>, transform_indices = @transform_4, window_bounds = array<i64: 32, 64>}, {pipeline_mode = #tpu.pipeline_mode<synchronous>, transform_indices = @transform_5, window_bounds = array<i64: 64, 32>}, {pipeline_mode = #tpu.pipeline_mode<synchronous>, transform_indices = @transform_6, window_bounds = array<i64: 8, 64>}, {transform_indices = @transform_7, window_bounds = array<i64: 8, 32>}]} {
    %c0 = arith.constant 0 : index
    %c0_0 = arith.constant 0 : index
    %0 = vector.load %arg1[%c0, %c0_0] : memref<8x32xbf16, #tpu.memory_space<vmem>>, vector<8x32xbf16>
    %1 = arith.extf %0 : vector<8x32xbf16> to vector<8x32xf32>
    %c0_1 = arith.constant 0 : index
    %c0_2 = arith.constant 0 : index
    %2 = vector.load %arg7[%c0_1, %c0_2] : memref<8x64xf32, #tpu.memory_space<vmem>>, vector<1x64xf32>
    %c1 = arith.constant 1 : index
    %c0_3 = arith.constant 0 : index
    %3 = vector.load %arg7[%c1, %c0_3] : memref<8x64xf32, #tpu.memory_space<vmem>>, vector<1x32xf32>
    %c2 = arith.constant 2 : index
    %c0_4 = arith.constant 0 : index
    %4 = vector.load %arg7[%c2, %c0_4] : memref<8x64xf32, #tpu.memory_space<vmem>>, vector<1x32xf32>
    %c3 = arith.constant 3 : index
    %c0_5 = arith.constant 0 : index
    %5 = vector.load %arg7[%c3, %c0_5] : memref<8x64xf32, #tpu.memory_space<vmem>>, vector<1x32xf32>
    %c4 = arith.constant 4 : index
    %c0_6 = arith.constant 0 : index
    %6 = vector.load %arg7[%c4, %c0_6] : memref<8x64xf32, #tpu.memory_space<vmem>>, vector<1x32xf32>
    %c5 = arith.constant 5 : index
    %c0_7 = arith.constant 0 : index
    %7 = vector.load %arg7[%c5, %c0_7] : memref<8x64xf32, #tpu.memory_space<vmem>>, vector<1x32xf32>
    %c6 = arith.constant 6 : index
    %c0_8 = arith.constant 0 : index
    %8 = vector.load %arg7[%c6, %c0_8] : memref<8x64xf32, #tpu.memory_space<vmem>>, vector<1x32xf32>
    %c0_9 = arith.constant 0 : index
    %c0_10 = arith.constant 0 : index
    %9 = vector.load %arg2[%c0_9, %c0_10] : memref<32x96xbf16, #tpu.memory_space<vmem>>, vector<32x96xbf16>
    %cst = arith.constant dense<0.000000e+00> : vector<8x96xf32>
    %10 = tpu.matmul %0, %9, %cst {dimension_numbers = #tpu.dot_dimension_numbers<[1], [0], [0], [1], [0, 0, 1, 1], [], []>} : vector<8x32xbf16>, vector<32x96xbf16>, vector<8x96xf32> -> vector<8x96xf32>
    %c0_11 = arith.constant 0 : index
    %c0_12 = arith.constant 0 : index
    %11 = vector.load %arg3[%c0_11, %c0_12] : memref<1x96xf32, #tpu.memory_space<vmem>>, vector<1x96xf32>
    %12 = vector.broadcast %11 : vector<1x96xf32> to vector<8x96xf32>
    %13 = arith.addf %10, %12 : vector<8x96xf32>
    %14 = vector.extract_strided_slice %13 {offsets = [0, 0], sizes = [8, 8], strides = [1, 1]} : vector<8x96xf32> to vector<8x8xf32>
    %15 = vector.extract_strided_slice %13 {offsets = [0, 8], sizes = [8, 8], strides = [1, 1]} : vector<8x96xf32> to vector<8x8xf32>
    %16 = vector.extract_strided_slice %13 {offsets = [0, 16], sizes = [8, 8], strides = [1, 1]} : vector<8x96xf32> to vector<8x8xf32>
    %17 = vector.extract_strided_slice %13 {offsets = [0, 24], sizes = [8, 8], strides = [1, 1]} : vector<8x96xf32> to vector<8x8xf32>
    %18 = vector.shape_cast %14 : vector<8x8xf32> to vector<1x8x8xf32>
    %19 = vector.shape_cast %15 : vector<8x8xf32> to vector<1x8x8xf32>
    %20 = vector.shape_cast %16 : vector<8x8xf32> to vector<1x8x8xf32>
    %21 = vector.shape_cast %17 : vector<8x8xf32> to vector<1x8x8xf32>
    %22 = tpu.concatenate %18, %19, %20, %21 in 0 : vector<1x8x8xf32>, vector<1x8x8xf32>, vector<1x8x8xf32>, vector<1x8x8xf32> -> vector<4x8x8xf32>
    %23 = vector.extract_strided_slice %13 {offsets = [0, 32], sizes = [8, 8], strides = [1, 1]} : vector<8x96xf32> to vector<8x8xf32>
    %24 = vector.extract_strided_slice %13 {offsets = [0, 40], sizes = [8, 8], strides = [1, 1]} : vector<8x96xf32> to vector<8x8xf32>
    %25 = vector.extract_strided_slice %13 {offsets = [0, 48], sizes = [8, 8], strides = [1, 1]} : vector<8x96xf32> to vector<8x8xf32>
    %26 = vector.extract_strided_slice %13 {offsets = [0, 56], sizes = [8, 8], strides = [1, 1]} : vector<8x96xf32> to vector<8x8xf32>
    %27 = vector.shape_cast %23 : vector<8x8xf32> to vector<1x8x8xf32>
    %28 = vector.shape_cast %24 : vector<8x8xf32> to vector<1x8x8xf32>
    %29 = vector.shape_cast %25 : vector<8x8xf32> to vector<1x8x8xf32>
    %30 = vector.shape_cast %26 : vector<8x8xf32> to vector<1x8x8xf32>
    %31 = tpu.concatenate %27, %28, %29, %30 in 0 : vector<1x8x8xf32>, vector<1x8x8xf32>, vector<1x8x8xf32>, vector<1x8x8xf32> -> vector<4x8x8xf32>
    %32 = vector.extract_strided_slice %13 {offsets = [0, 64], sizes = [8, 8], strides = [1, 1]} : vector<8x96xf32> to vector<8x8xf32>
    %33 = vector.extract_strided_slice %13 {offsets = [0, 72], sizes = [8, 8], strides = [1, 1]} : vector<8x96xf32> to vector<8x8xf32>
    %34 = vector.extract_strided_slice %13 {offsets = [0, 80], sizes = [8, 8], strides = [1, 1]} : vector<8x96xf32> to vector<8x8xf32>
    %35 = vector.extract_strided_slice %13 {offsets = [0, 88], sizes = [8, 8], strides = [1, 1]} : vector<8x96xf32> to vector<8x8xf32>
    %36 = vector.shape_cast %32 : vector<8x8xf32> to vector<1x8x8xf32>
    %37 = vector.shape_cast %33 : vector<8x8xf32> to vector<1x8x8xf32>
    %38 = vector.shape_cast %34 : vector<8x8xf32> to vector<1x8x8xf32>
    %39 = vector.shape_cast %35 : vector<8x8xf32> to vector<1x8x8xf32>
    %40 = tpu.concatenate %36, %37, %38, %39 in 0 : vector<1x8x8xf32>, vector<1x8x8xf32>, vector<1x8x8xf32>, vector<1x8x8xf32> -> vector<4x8x8xf32>
    %41 = arith.truncf %22 : vector<4x8x8xf32> to vector<4x8x8xbf16>
    %42 = arith.truncf %31 : vector<4x8x8xf32> to vector<4x8x8xbf16>
    "tpu.trace_start"() <{level = 10 : i32, message = "hqd,hkd->hqk"}> : () -> ()
    %cst_13 = arith.constant dense<0.000000e+00> : vector<4x8x8xf32>
    %43 = tpu.matmul %41, %42, %cst_13 {dimension_numbers = #tpu.dot_dimension_numbers<[2], [2], [1], [1], [0, 0, 0, 1, 1, 1], [0], [0]>} : vector<4x8x8xbf16>, vector<4x8x8xbf16>, vector<4x8x8xf32> -> vector<4x8x8xf32>
    "tpu.trace_stop"() : () -> ()
    %cst_14 = arith.constant dense<0xFF800000> : vector<4x8xf32>
    %44 = vector.multi_reduction <maximumf>, %43, %cst_14 [2] : vector<4x8x8xf32> to vector<4x8xf32>
    %45 = vector.shape_cast %44 : vector<4x8xf32> to vector<4x8x1xf32>
    %46 = vector.broadcast %45 : vector<4x8x1xf32> to vector<4x8x8xf32>
    %47 = arith.subf %43, %46 : vector<4x8x8xf32>
    %48 = math.exp %47 : vector<4x8x8xf32>
    %cst_15 = arith.constant dense<0.000000e+00> : vector<4x8xf32>
    %49 = vector.multi_reduction <add>, %48, %cst_15 [2] : vector<4x8x8xf32> to vector<4x8xf32>
    %50 = vector.shape_cast %49 : vector<4x8xf32> to vector<4x8x1xf32>
    %51 = vector.broadcast %50 : vector<4x8x1xf32> to vector<4x8x8xf32>
    %52 = arith.divf %48, %51 : vector<4x8x8xf32>
    %53 = arith.truncf %52 : vector<4x8x8xf32> to vector<4x8x8xbf16>
    %54 = arith.truncf %40 : vector<4x8x8xf32> to vector<4x8x8xbf16>
    "tpu.trace_start"() <{level = 10 : i32, message = "hqk,hkd->hqd"}> : () -> ()
    %cst_16 = arith.constant dense<0.000000e+00> : vector<4x8x8xf32>
    %55 = tpu.matmul %53, %54, %cst_16 {dimension_numbers = #tpu.dot_dimension_numbers<[2], [1], [1], [2], [0, 0, 0, 1, 1, 2], [0], [0]>} : vector<4x8x8xbf16>, vector<4x8x8xbf16>, vector<4x8x8xf32> -> vector<4x8x8xf32>
    "tpu.trace_stop"() : () -> ()
    %56 = vector.extract_strided_slice %55 {offsets = [0, 0, 0], sizes = [1, 8, 8], strides = [1, 1, 1]} : vector<4x8x8xf32> to vector<1x8x8xf32>
    %57 = vector.shape_cast %56 : vector<1x8x8xf32> to vector<8x8xf32>
    %58 = vector.extract_strided_slice %55 {offsets = [1, 0, 0], sizes = [1, 8, 8], strides = [1, 1, 1]} : vector<4x8x8xf32> to vector<1x8x8xf32>
    %59 = vector.shape_cast %58 : vector<1x8x8xf32> to vector<8x8xf32>
    %60 = vector.extract_strided_slice %55 {offsets = [2, 0, 0], sizes = [1, 8, 8], strides = [1, 1, 1]} : vector<4x8x8xf32> to vector<1x8x8xf32>
    %61 = vector.shape_cast %60 : vector<1x8x8xf32> to vector<8x8xf32>
    %62 = vector.extract_strided_slice %55 {offsets = [3, 0, 0], sizes = [1, 8, 8], strides = [1, 1, 1]} : vector<4x8x8xf32> to vector<1x8x8xf32>
    %63 = vector.shape_cast %62 : vector<1x8x8xf32> to vector<8x8xf32>
    %64 = tpu.concatenate %57, %59, %61, %63 in 1 : vector<8x8xf32>, vector<8x8xf32>, vector<8x8xf32>, vector<8x8xf32> -> vector<8x32xf32>
    %65 = arith.truncf %64 : vector<8x32xf32> to vector<8x32xbf16>
    %c0_17 = arith.constant 0 : index
    %c0_18 = arith.constant 0 : index
    %66 = vector.load %arg4[%c0_17, %c0_18] : memref<32x32xbf16, #tpu.memory_space<vmem>>, vector<32x32xbf16>
    %cst_19 = arith.constant dense<0.000000e+00> : vector<8x32xf32>
    %67 = tpu.matmul %65, %66, %cst_19 {dimension_numbers = #tpu.dot_dimension_numbers<[1], [0], [0], [1], [0, 0, 1, 1], [], []>} : vector<8x32xbf16>, vector<32x32xbf16>, vector<8x32xf32> -> vector<8x32xf32>
    %68 = vector.broadcast %3 : vector<1x32xf32> to vector<8x32xf32>
    %69 = arith.addf %67, %68 : vector<8x32xf32>
    %70 = arith.addf %1, %69 : vector<8x32xf32>
    %cst_20 = arith.constant dense<0.000000e+00> : vector<8xf32>
    %71 = vector.multi_reduction <add>, %70, %cst_20 [1] : vector<8x32xf32> to vector<8xf32>
    %72 = vector.shape_cast %71 : vector<8xf32> to vector<8x1xf32>
    %cst_21 = arith.constant 3.200000e+01 : f32
    %73 = vector.broadcast %cst_21 : f32 to vector<8x1xf32>
    %74 = arith.divf %72, %73 : vector<8x1xf32>
    %75 = vector.broadcast %74 : vector<8x1xf32> to vector<8x32xf32>
    %76 = arith.subf %70, %75 : vector<8x32xf32>
    %77 = arith.mulf %76, %76 : vector<8x32xf32>
    %cst_22 = arith.constant dense<0.000000e+00> : vector<8xf32>
    %78 = vector.multi_reduction <add>, %77, %cst_22 [1] : vector<8x32xf32> to vector<8xf32>
    %79 = vector.shape_cast %78 : vector<8xf32> to vector<8x1xf32>
    %cst_23 = arith.constant 3.200000e+01 : f32
    %80 = vector.broadcast %cst_23 : f32 to vector<8x1xf32>
    %81 = arith.divf %79, %80 : vector<8x1xf32>
    %82 = vector.broadcast %74 : vector<8x1xf32> to vector<8x32xf32>
    %83 = arith.subf %70, %82 : vector<8x32xf32>
    %cst_24 = arith.constant 9.99999974E-6 : f32
    %84 = vector.broadcast %cst_24 : f32 to vector<8x1xf32>
    %85 = arith.addf %81, %84 : vector<8x1xf32>
    %86 = math.rsqrt %85 : vector<8x1xf32>
    %87 = vector.broadcast %86 : vector<8x1xf32> to vector<8x32xf32>
    %88 = arith.mulf %83, %87 : vector<8x32xf32>
    %89 = vector.broadcast %5 : vector<1x32xf32> to vector<8x32xf32>
    %90 = arith.mulf %88, %89 : vector<8x32xf32>
    %91 = vector.broadcast %6 : vector<1x32xf32> to vector<8x32xf32>
    %92 = arith.addf %90, %91 : vector<8x32xf32>
    %93 = arith.truncf %92 : vector<8x32xf32> to vector<8x32xbf16>
    %c0_25 = arith.constant 0 : index
    %c0_26 = arith.constant 0 : index
    %94 = vector.load %arg5[%c0_25, %c0_26] : memref<32x64xbf16, #tpu.memory_space<vmem>>, vector<32x64xbf16>
    %cst_27 = arith.constant dense<0.000000e+00> : vector<8x64xf32>
    %95 = tpu.matmul %93, %94, %cst_27 {dimension_numbers = #tpu.dot_dimension_numbers<[1], [0], [0], [1], [0, 0, 1, 1], [], []>} : vector<8x32xbf16>, vector<32x64xbf16>, vector<8x64xf32> -> vector<8x64xf32>
    %96 = vector.broadcast %2 : vector<1x64xf32> to vector<8x64xf32>
    %97 = arith.addf %95, %96 : vector<8x64xf32>
    %cst_28 = arith.constant 0.000000e+00 : f32
    %98 = vector.broadcast %cst_28 : f32 to vector<8x64xf32>
    %99 = arith.maximumf %97, %98 : vector<8x64xf32>
    %100 = arith.truncf %99 : vector<8x64xf32> to vector<8x64xbf16>
    %c0_29 = arith.constant 0 : index
    %c0_30 = arith.constant 0 : index
    %101 = vector.load %arg6[%c0_29, %c0_30] : memref<64x32xbf16, #tpu.memory_space<vmem>>, vector<64x32xbf16>
    %cst_31 = arith.constant dense<0.000000e+00> : vector<8x32xf32>
    %102 = tpu.matmul %100, %101, %cst_31 {dimension_numbers = #tpu.dot_dimension_numbers<[1], [0], [0], [1], [0, 0, 1, 1], [], []>} : vector<8x64xbf16>, vector<64x32xbf16>, vector<8x32xf32> -> vector<8x32xf32>
    %103 = vector.broadcast %4 : vector<1x32xf32> to vector<8x32xf32>
    %104 = arith.addf %102, %103 : vector<8x32xf32>
    %105 = arith.addf %92, %104 : vector<8x32xf32>
    %cst_32 = arith.constant dense<0.000000e+00> : vector<8xf32>
    %106 = vector.multi_reduction <add>, %105, %cst_32 [1] : vector<8x32xf32> to vector<8xf32>
    %107 = vector.shape_cast %106 : vector<8xf32> to vector<8x1xf32>
    %cst_33 = arith.constant 3.200000e+01 : f32
    %108 = vector.broadcast %cst_33 : f32 to vector<8x1xf32>
    %109 = arith.divf %107, %108 : vector<8x1xf32>
    %110 = vector.broadcast %109 : vector<8x1xf32> to vector<8x32xf32>
    %111 = arith.subf %105, %110 : vector<8x32xf32>
    %112 = arith.mulf %111, %111 : vector<8x32xf32>
    %cst_34 = arith.constant dense<0.000000e+00> : vector<8xf32>
    %113 = vector.multi_reduction <add>, %112, %cst_34 [1] : vector<8x32xf32> to vector<8xf32>
    %114 = vector.shape_cast %113 : vector<8xf32> to vector<8x1xf32>
    %cst_35 = arith.constant 3.200000e+01 : f32
    %115 = vector.broadcast %cst_35 : f32 to vector<8x1xf32>
    %116 = arith.divf %114, %115 : vector<8x1xf32>
    %117 = vector.broadcast %109 : vector<8x1xf32> to vector<8x32xf32>
    %118 = arith.subf %105, %117 : vector<8x32xf32>
    %cst_36 = arith.constant 9.99999974E-6 : f32
    %119 = vector.broadcast %cst_36 : f32 to vector<8x1xf32>
    %120 = arith.addf %116, %119 : vector<8x1xf32>
    %121 = math.rsqrt %120 : vector<8x1xf32>
    %122 = vector.broadcast %121 : vector<8x1xf32> to vector<8x32xf32>
    %123 = arith.mulf %118, %122 : vector<8x32xf32>
    %124 = vector.broadcast %7 : vector<1x32xf32> to vector<8x32xf32>
    %125 = arith.mulf %123, %124 : vector<8x32xf32>
    %126 = vector.broadcast %8 : vector<1x32xf32> to vector<8x32xf32>
    %127 = arith.addf %125, %126 : vector<8x32xf32>
    %c0_37 = arith.constant 0 : index
    %c0_38 = arith.constant 0 : index
    %128 = vector.load %arg8[%c0_37, %c0_38] : memref<8x32xf32, #tpu.memory_space<vmem>>, vector<8x32xf32>
    tpu.vector_store %arg8[%c0_37, %c0_38], %127 {strides = array<i32>} : memref<8x32xf32, #tpu.memory_space<vmem>>, vector<8x32xf32>,
    return
  }
  func.func @transform_0(%arg0: i32) -> (i32, i32) {
    %c0_i32 = arith.constant 0 : i32
    %c0_i32_0 = arith.constant 0 : i32
    return %arg0, %c0_i32 : i32, i32
  }
  func.func @transform_1(%arg0: i32) -> (i32, i32) {
    %c0_i32 = arith.constant 0 : i32
    %c0_i32_0 = arith.constant 0 : i32
    %c0_i32_1 = arith.constant 0 : i32
    return %c0_i32, %c0_i32_0 : i32, i32
  }
  func.func @transform_2(%arg0: i32) -> (i32, i32) {
    %c0_i32 = arith.constant 0 : i32
    %c0_i32_0 = arith.constant 0 : i32
    %c0_i32_1 = arith.constant 0 : i32
    return %c0_i32, %c0_i32_0 : i32, i32
  }
  func.func @transform_3(%arg0: i32) -> (i32, i32) {
    %c0_i32 = arith.constant 0 : i32
    %c0_i32_0 = arith.constant 0 : i32
    %c0_i32_1 = arith.constant 0 : i32
    return %c0_i32, %c0_i32_0 : i32, i32
  }
  func.func @transform_4(%arg0: i32) -> (i32, i32) {
    %c0_i32 = arith.constant 0 : i32
    %c0_i32_0 = arith.constant 0 : i32
    %c0_i32_1 = arith.constant 0 : i32
    return %c0_i32, %c0_i32_0 : i32, i32
  }
  func.func @transform_5(%arg0: i32) -> (i32, i32) {
    %c0_i32 = arith.constant 0 : i32
    %c0_i32_0 = arith.constant 0 : i32
    %c0_i32_1 = arith.constant 0 : i32
    return %c0_i32, %c0_i32_0 : i32, i32
  }
  func.func @transform_6(%arg0: i32) -> (i32, i32) {
    %c0_i32 = arith.constant 0 : i32
    %c0_i32_0 = arith.constant 0 : i32
    %c0_i32_1 = arith.constant 0 : i32
    return %c0_i32, %c0_i32_0 : i32, i32
  }
  func.func @transform_7(%arg0: i32) -> (i32, i32) {
    %c0_i32 = arith.constant 0 : i32
    %c0_i32_0 = arith.constant 0 : i32
    return %arg0, %c0_i32 : i32, i32
  }
}

</mosaic_0001>

<llo_original>
// kernel: tpu_custom_call.1
$region0: #{tpu_custom_call.1}
  #allocation0 [shape = 'u32[]', space=smem, size = 0x4, offset = 0x4, fixed_abs, tag = 'smem constant byte address 0x4 - core index']
  #allocation1 [shape = 'u32[144,128]{1,0:T(1,128)}', space=vmem, size = 0x12000, scoped, tag = 'internal scratch']
  %s0 = inlined_call_operand.hbm [shape: bf16[16,32], index: 0, kind: input, shape index: {}]
  %s1 = inlined_call_operand.vmem [shape: bf16[32,96], index: 1, kind: input, shape index: {}]
  %s2 = inlined_call_operand.vmem [shape: f32[1,96], index: 2, kind: input, shape index: {}]
  %s3 = inlined_call_operand.vmem [shape: bf16[32,32], index: 3, kind: input, shape index: {}]
  %s4 = inlined_call_operand.vmem [shape: bf16[32,64], index: 4, kind: input, shape index: {}]
  %s5 = inlined_call_operand.vmem [shape: bf16[64,32], index: 5, kind: input, shape index: {}]
  %s6 = inlined_call_operand.hbm [shape: f32[8,64], index: 6, kind: input, shape index: {}]
  %s7 = inlined_call_operand.hbm [shape: f32[16,32], index: 7, kind: output, shape index: {}]
  %s8 = sld [smem:[#allocation0]]
  $region69: #{tpu_custom_call.1} parent=0
    _
  %s10 = ssub.s32 1, %s8
  %s11 = scalar_select 0, %s10, %s8
  $region1: #{tpu_custom_call.1} parent=0
    #allocation2 [shape = 'u8[4096]{0}', space=vmem, size = 0x1000, scoped, tag = 'input window, operand 0']
    #allocation3 [shape = 's32[2]{0}', space=sflag, size = 0x8, scoped, tag = 'scoped memory for tpu_custom_call.1']
    #allocation4 [shape = 's32[2]{0}', space=sflag, size = 0x8, scoped, tag = 'scoped memory for tpu_custom_call.1']
    #allocation5 [shape = 'u8[4096]{0}', space=vmem, size = 0x1000, scoped, tag = 'input window, operand 6, single buffered']
    #allocation6 [shape = 's32[1]{0}', space=sflag, size = 0x4, scoped, tag = 'scoped memory for tpu_custom_call.1']
    #allocation7 [shape = 'u8[8192]{0}', space=vmem, size = 0x2000, scoped, tag = 'output window, operand 0']
    %12 = vsyncpa [#allocation3], 0
    %s13 = scalar_lea.sflag [#allocation3], 1
    %14 = vsyncpa %s13, 0
    %15 = vsyncpa [#allocation6], 0
    %16 = vsyncpa [#allocation4], 0
    %s17 = scalar_lea.sflag [#allocation4], 1
    %18 = vsyncpa %s17, 0
    loop: start=0, step=1, limit=4
    $region2: #{tpu_custom_call.1} parent=1 // loop_pre_header
      _
    $region3: #{tpu_custom_call.1} parent=1 // loop_header
      %s20 = sphi 0, %s24
      %p21 = scmp.ge.s32.totalorder %s20, 4
      %s30 = sphi 0, %s32
      %s33 = sphi 0, %s30
      %s34 = sphi 0, %s33
      %s50 = sphi 0, %s34
      %s54 = sphi 0, %s54
      %s56 = sphi 0, %s54
      %s57 = sphi 0, %s56
      %s71 = sphi 0, %s57
      %s75 = sphi 0, %s75
      %s77 = sphi 0, %s75
      %s78 = sphi 0, %s77
      %s92 = sphi 0, %s78
      %s96 = sphi 0, %s96
      %s98 = sphi 0, %s96
      %s99 = sphi 0, %s98
      %s113 = sphi 0, %s99
      %s117 = sphi 0, %s117
      %s119 = sphi 0, %s117
      %s120 = sphi 0, %s119
      %s134 = sphi 0, %s120
      %s138 = sphi 0, %s138
      %s140 = sphi 0, %s138
      %s141 = sphi 0, %s140
      %s155 = sphi 0, %s141
      %s159 = sphi 0, %s159
      %s161 = sphi 0, %s159
      %s162 = sphi 0, %s161
      %s176 = sphi 0, %s162
      %s182 = sphi 0, %s184
      %s185 = sphi 0, %s182
      %s186 = sphi 0, %s185
      %s202 = sphi 0, %s186
    $region4: #{tpu_custom_call.1} parent=1 // loop_header_branch
      %23 = sbr.rel (%p21) target = $region8
    $region5: #{tpu_custom_call.1} parent=1 // loop_body
      %s25 = ssub.s32 %s20, 1
      %s26 = ssub.s32 %s20, 2
      %s27 = sadd.s32 %s20, 1
      %s28 = ssub.s32 %s20, %s27
      %p29 = scmp.eq.s32.totalorder %s28, 0
      %s31 = sadd.s32 %s30, 1
      %s32 = scalar_select %p29, %s30, %s31
      %p35 = pneg %p29
      %p36 = scmp.eq.s32.totalorder %s20, 1
      %p37 = por %p35, %p36
      %p38 = scmp.ne.s32.totalorder %s30, %s33
      %p39 = scmp.eq.s32.totalorder %s20, 0
      %p40 = por %p38, %p39
      %p41 = scmp.ne.s32.totalorder %s30, %s33
      %p42 = scmp.eq.s32.totalorder %s25, 1
      %p43 = por %p41, %p42
      %p44 = scmp.ne.s32.totalorder %s33, %s34
      %p45 = scmp.eq.s32.totalorder %s25, 0
      %p46 = por %p44, %p45
      %p47 = scmp.ne.s32.totalorder %s33, %s34
      %p48 = scmp.eq.s32.totalorder %s26, 1
      %p49 = por %p47, %p48
      %p51 = scmp.ne.s32.totalorder %s34, %s50
      %p52 = scmp.eq.s32.totalorder %s26, 0
      %p53 = por %p51, %p52
      %s55 = sadd.s32 %s54, 1
      %p58 = scmp.eq.s32.totalorder %s20, 1
      %p59 = scmp.ne.s32.totalorder %s54, %s56
      %p60 = scmp.eq.s32.totalorder %s20, 0
      %p61 = por %p59, %p60
      %p62 = scmp.ne.s32.totalorder %s54, %s56
      %p63 = scmp.eq.s32.totalorder %s25, 1
      %p64 = por %p62, %p63
      %p65 = scmp.ne.s32.totalorder %s56, %s57
      %p66 = scmp.eq.s32.totalorder %s25, 0
      %p67 = por %p65, %p66
      %p68 = scmp.ne.s32.totalorder %s56, %s57
      %p69 = scmp.eq.s32.totalorder %s26, 1
      %p70 = por %p68, %p69
      %p72 = scmp.ne.s32.totalorder %s57, %s71
      %p73 = scmp.eq.s32.totalorder %s26, 0
      %p74 = por %p72, %p73
      %s76 = sadd.s32 %s75, 1
      %p79 = scmp.eq.s32.totalorder %s20, 1
      %p80 = scmp.ne.s32.totalorder %s75, %s77
      %p81 = scmp.eq.s32.totalorder %s20, 0
      %p82 = por %p80, %p81
      %p83 = scmp.ne.s32.totalorder %s75, %s77
      %p84 = scmp.eq.s32.totalorder %s25, 1
      %p85 = por %p83, %p84
      %p86 = scmp.ne.s32.totalorder %s77, %s78
      %p87 = scmp.eq.s32.totalorder %s25, 0
      %p88 = por %p86, %p87
      %p89 = scmp.ne.s32.totalorder %s77, %s78
      %p90 = scmp.eq.s32.totalorder %s26, 1
      %p91 = por %p89, %p90
      %p93 = scmp.ne.s32.totalorder %s78, %s92
      %p94 = scmp.eq.s32.totalorder %s26, 0
      %p95 = por %p93, %p94
      %s97 = sadd.s32 %s96, 1
      %p100 = scmp.eq.s32.totalorder %s20, 1
      %p101 = scmp.ne.s32.totalorder %s96, %s98
      %p102 = scmp.eq.s32.totalorder %s20, 0
      %p103 = por %p101, %p102
      %p104 = scmp.ne.s32.totalorder %s96, %s98
      %p105 = scmp.eq.s32.totalorder %s25, 1
      %p106 = por %p104, %p105
      %p107 = scmp.ne.s32.totalorder %s98, %s99
      %p108 = scmp.eq.s32.totalorder %s25, 0
      %p109 = por %p107, %p108
      %p110 = scmp.ne.s32.totalorder %s98, %s99
      %p111 = scmp.eq.s32.totalorder %s26, 1
      %p112 = por %p110, %p111
      %p114 = scmp.ne.s32.totalorder %s99, %s113
      %p115 = scmp.eq.s32.totalorder %s26, 0
      %p116 = por %p114, %p115
      %s118 = sadd.s32 %s117, 1
      %p121 = scmp.eq.s32.totalorder %s20, 1
      %p122 = scmp.ne.s32.totalorder %s117, %s119
      %p123 = scmp.eq.s32.totalorder %s20, 0
      %p124 = por %p122, %p123
      %p125 = scmp.ne.s32.totalorder %s117, %s119
      %p126 = scmp.eq.s32.totalorder %s25, 1
      %p127 = por %p125, %p126
      %p128 = scmp.ne.s32.totalorder %s119, %s120
      %p129 = scmp.eq.s32.totalorder %s25, 0
      %p130 = por %p128, %p129
      %p131 = scmp.ne.s32.totalorder %s119, %s120
      %p132 = scmp.eq.s32.totalorder %s26, 1
      %p133 = por %p131, %p132
      %p135 = scmp.ne.s32.totalorder %s120, %s134
      %p136 = scmp.eq.s32.totalorder %s26, 0
      %p137 = por %p135, %p136
      %s139 = sadd.s32 %s138, 1
      %p142 = scmp.eq.s32.totalorder %s20, 1
      %p143 = scmp.ne.s32.totalorder %s138, %s140
      %p144 = scmp.eq.s32.totalorder %s20, 0
      %p145 = por %p143, %p144
      %p146 = scmp.ne.s32.totalorder %s138, %s140
      %p147 = scmp.eq.s32.totalorder %s25, 1
      %p148 = por %p146, %p147
      %p149 = scmp.ne.s32.totalorder %s140, %s141
      %p150 = scmp.eq.s32.totalorder %s25, 0
      %p151 = por %p149, %p150
      %p152 = scmp.ne.s32.totalorder %s140, %s141
      %p153 = scmp.eq.s32.totalorder %s26, 1
      %p154 = por %p152, %p153
      %p156 = scmp.ne.s32.totalorder %s141, %s155
      %p157 = scmp.eq.s32.totalorder %s26, 0
      %p158 = por %p156, %p157
      %s160 = sadd.s32 %s159, 1
      %p163 = scmp.eq.s32.totalorder %s20, 1
      %p164 = scmp.ne.s32.totalorder %s159, %s161
      %p165 = scmp.eq.s32.totalorder %s20, 0
      %p166 = por %p164, %p165
      %p167 = scmp.ne.s32.totalorder %s159, %s161
      %p168 = scmp.eq.s32.totalorder %s25, 1
      %p169 = por %p167, %p168
      %p170 = scmp.ne.s32.totalorder %s161, %s162
      %p171 = scmp.eq.s32.totalorder %s25, 0
      %p172 = por %p170, %p171
      %p173 = scmp.ne.s32.totalorder %s161, %s162
      %p174 = scmp.eq.s32.totalorder %s26, 1
      %p175 = por %p173, %p174
      %p177 = scmp.ne.s32.totalorder %s162, %s176
      %p178 = scmp.eq.s32.totalorder %s26, 0
      %p179 = por %p177, %p178
      %s180 = ssub.s32 %s20, %s27
      %p181 = scmp.eq.s32.totalorder %s180, 0
      %s183 = sadd.s32 %s182, 1
      %s184 = scalar_select %p181, %s182, %s183
      %p187 = pneg %p181
      %p188 = scmp.eq.s32.totalorder %s20, 1
      %p189 = por %p187, %p188
      %p190 = scmp.ne.s32.totalorder %s182, %s185
      %p191 = scmp.eq.s32.totalorder %s20, 0
      %p192 = por %p190, %p191
      %p193 = scmp.ne.s32.totalorder %s182, %s185
      %p194 = scmp.eq.s32.totalorder %s25, 1
      %p195 = por %p193, %p194
      %p196 = scmp.ne.s32.totalorder %s185, %s186
      %p197 = scmp.eq.s32.totalorder %s25, 0
      %p198 = por %p196, %p197
      %p199 = scmp.ne.s32.totalorder %s185, %s186
      %p200 = scmp.eq.s32.totalorder %s26, 1
      %p201 = por %p199, %p200
      %p203 = scmp.ne.s32.totalorder %s186, %s202
      %p204 = scmp.eq.s32.totalorder %s26, 0
      %p205 = por %p203, %p204
      %p206 = scmp.le.s32.totalorder 1, %s20
      %p207 = scmp.lt.s32.totalorder %s20, 3
      %p208 = pnand %p206, %p207
      %p209 = pneg %p208
      // Predicated region
      $region9: #{tpu_custom_call.1} parent=5 // pred_check
        _
      $region10: #{tpu_custom_call.1} parent=5 // pred_check_branch
        %211 = sbr.rel (%p208) target = $region12
      $region11: #{tpu_custom_call.1} parent=5 // pred_region
        %s212 = ssub.s32 %s20, 1
        // Predicated region
        $region13: #{tpu_custom_call.1} parent=11 // pred_check
          %p213 = pneg %p67
        $region14: #{tpu_custom_call.1} parent=11 // pred_check_branch
          %215 = sbr.rel (%p213) target = $region16
        $region15: #{tpu_custom_call.1} parent=11 // pred_region
          _
        $region16: #{tpu_custom_call.1} parent=11 // pred_fallthru
          _
        // Predicated region
        $region17: #{tpu_custom_call.1} parent=11 // pred_check
          %p216 = pneg %p88
        $region18: #{tpu_custom_call.1} parent=11 // pred_check_branch
          %218 = sbr.rel (%p216) target = $region20
        $region19: #{tpu_custom_call.1} parent=11 // pred_region
          _
        $region20: #{tpu_custom_call.1} parent=11 // pred_fallthru
          _
        // Predicated region
        $region21: #{tpu_custom_call.1} parent=11 // pred_check
          %p219 = pneg %p109
        $region22: #{tpu_custom_call.1} parent=11 // pred_check_branch
          %221 = sbr.rel (%p219) target = $region24
        $region23: #{tpu_custom_call.1} parent=11 // pred_region
          _
        $region24: #{tpu_custom_call.1} parent=11 // pred_fallthru
          _
        // Predicated region
        $region25: #{tpu_custom_call.1} parent=11 // pred_check
          %p222 = pneg %p130
        $region26: #{tpu_custom_call.1} parent=11 // pred_check_branch
          %224 = sbr.rel (%p222) target = $region28
        $region27: #{tpu_custom_call.1} parent=11 // pred_region
          _
        $region28: #{tpu_custom_call.1} parent=11 // pred_fallthru
          _
        // Predicated region
        $region29: #{tpu_custom_call.1} parent=11 // pred_check
          %p225 = pneg %p151
        $region30: #{tpu_custom_call.1} parent=11 // pred_check_branch
          %227 = sbr.rel (%p225) target = $region32
        $region31: #{tpu_custom_call.1} parent=11 // pred_region
          _
        $region32: #{tpu_custom_call.1} parent=11 // pred_fallthru
          _
        // Predicated region
        $region33: #{tpu_custom_call.1} parent=11 // pred_check
          %p228 = pneg %p172
        $region34: #{tpu_custom_call.1} parent=11 // pred_check_branch
          %230 = sbr.rel (%p228) target = $region36
        $region35: #{tpu_custom_call.1} parent=11 // pred_region
          %s232 = ssub.s32 128, 128
          %233 = vsyncadd [#allocation6], %s232
          %s235 = sshll.u32 [#allocation5], 4
          %s236 = int_to_ptr.vmem [resolvable:$true] %s235
          %238 = dma.hbm_to_vmem [thread:$0]  %s6, 128, %s236, [#allocation6]
        $region36: #{tpu_custom_call.1} parent=11 // pred_fallthru
          _
      $region12: #{tpu_custom_call.1} parent=5 // pred_fallthru
        _
      %p239 = scmp.lt.s32.totalorder %s20, 2
      // Predicated region
      $region37: #{tpu_custom_call.1} parent=5 // pred_check
        %p240 = pneg %p239
      $region38: #{tpu_custom_call.1} parent=5 // pred_check_branch
        %242 = sbr.rel (%p240) target = $region40
      $region39: #{tpu_custom_call.1} parent=5 // pred_region
        // Predicated region
        $region41: #{tpu_custom_call.1} parent=39 // pred_check
          %p243 = pneg %p40
        $region42: #{tpu_custom_call.1} parent=39 // pred_check_branch
          %245 = sbr.rel (%p243) target = $region44
        $region43: #{tpu_custom_call.1} parent=39 // pred_region
          %s246 = sand.u32 %s30, 1
          %s247 = scalar_lea.sflag [#allocation3], %s246
          %s248 = sand.u32 %s30, 1
          %s249 = smul.addr %s248, 4
          %s250 = scalar_lea.vmem [#allocation2], %s249
          %s252 = ssub.s32 64, 64
          %253 = vsyncadd %s247, %s252
          %s254 = smul.addr %s20, 64
          %s255 = scalar_lea.hbm %s0, %s254
          %s257 = sshll.u32 %s250, 4
          %s258 = int_to_ptr.vmem [resolvable:$true] %s257
          %260 = dma.hbm_to_vmem [thread:$0]  %s255, 64, %s258, %s247
        $region44: #{tpu_custom_call.1} parent=39 // pred_fallthru
          _
      $region40: #{tpu_custom_call.1} parent=5 // pred_fallthru
        _
      %p261 = scmp.le.s32.totalorder 1, %s20
      %p262 = scmp.lt.s32.totalorder %s20, 3
      %p263 = pnand %p261, %p262
      %p264 = pneg %p263
      // Predicated region
      $region45: #{tpu_custom_call.1} parent=5 // pred_check
        _
      $region46: #{tpu_custom_call.1} parent=5 // pred_check_branch
        %266 = sbr.rel (%p263) target = $region48
      $region47: #{tpu_custom_call.1} parent=5 // pred_region
        %s267 = ssub.s32 %s20, 1
        %s268 = sand.u32 %s33, 1
        %s269 = scalar_lea.sflag [#allocation3], %s268
        %s270 = sand.u32 %s33, 1
        %s271 = smul.addr %s270, 4
        %s272 = scalar_lea.vmem [#allocation2], %s271
        // Predicated region
        $region49: #{tpu_custom_call.1} parent=47 // pred_check
          %p273 = pneg %p46
        $region50: #{tpu_custom_call.1} parent=47 // pred_check_branch
          %275 = sbr.rel (%p273) target = $region52
        $region51: #{tpu_custom_call.1} parent=47 // pred_region
          %276 = dma.done %s269, 64
        $region52: #{tpu_custom_call.1} parent=47 // pred_fallthru
          _
        // Predicated region
        $region53: #{tpu_custom_call.1} parent=47 // pred_check
          %p277 = pneg %p172
        $region54: #{tpu_custom_call.1} parent=47 // pred_check_branch
          %279 = sbr.rel (%p277) target = $region56
        $region55: #{tpu_custom_call.1} parent=47 // pred_region
          %280 = dma.done [#allocation6], 128
        $region56: #{tpu_custom_call.1} parent=47 // pred_fallthru
          _
        %s281 = sand.u32 %s33, 1
        %s282 = scalar_lea.sflag [#allocation3], %s281
        %s283 = sand.u32 %s33, 1
        %s284 = smul.addr %s283, 4
        %s285 = scalar_lea.vmem [#allocation2], %s284
        %p286 = pneg %p46
        %p287 = pneg %p43
        %p288 = pneg %p67
        %p289 = pneg %p64
        %p290 = pneg %p88
        %p291 = pneg %p85
        %p292 = pneg %p109
        %p293 = pneg %p106
        %p294 = pneg %p130
        %p295 = pneg %p127
        %p296 = pneg %p151
        %p297 = pneg %p148
        %p298 = pneg %p172
        %p299 = pneg %p169
        %p300 = pneg %p198
        %p301 = pneg %p195
        %s302 = sand.u32 %s185, 1
        %s303 = scalar_lea.sflag [#allocation4], %s302
        %s304 = sand.u32 %s185, 1
        %s305 = smul.addr %s304, 8
        %s306 = scalar_lea.vmem [#allocation7], %s305
        %v308 = vld [vmem:[%s272] sm:$0xf]
        %v309 = vunpack.c.l.bf16 %v308
        %v310 = vld [vmem:[#allocation5] sm:$0x1]
        %v311 = vld [vmem:[#allocation5 + $0x1] sm:$0x1]
        %v312 = vld [vmem:[#allocation5 + $0x2] sm:$0x1]
        %v313 = vld [vmem:[#allocation5 + $0x3] sm:$0x1]
        %v314 = vld [vmem:[#allocation5 + $0x4] sm:$0x1]
        %v315 = vld [vmem:[#allocation5 + $0x5] sm:$0x1]
        %v316 = vld [vmem:[#allocation5 + $0x6] sm:$0x1]
        %v317 = vld [vmem:[%s1] sm:$0xf]
        %v318 = vld [vmem:[%s1 + $0x4] sm:$0xf]
        %v319 = vld [vmem:[%s1 + $0x8] sm:$0xf]
        %v320 = vld [vmem:[%s1 + $0xc] sm:$0xf]
        %v321 = vld [vmem:[%s2] sm:$0x1]
        %v323 = vlaneseq
        %v324 = vshrl.u32 %v323, 7
        %v325 = vsub.s32 0, %v324
        %v326 = vrot.slane %v321, %v325
        %v332 = vunpack.c.l.b16 %v317
        %v333 = vunpack.c.l.b16 %v318
        %v334 = vunpack.c.l.b16 %v319
        %v335 = vunpack.c.l.b16 %v320
        %v336 = vpack.c.b16 %v333, %v332
        %v337 = vpack.c.b16 %v335, %v334
        %vm340 = vcmask 261120
        %v342 = vsel %vm340, %v308, 0
        %344 = vmatprep.subr.bf16.mxu0 0
        %345 = vmatpush1.bf16.msra.mxu0 %v336
        %346 = vmatprep.subr.bf16.mxu0 0
        %347 = vmatpush1.bf16.msra.mxu0 %v337
        %348 = vmatprep.subr.bf16.mxu0 0
        %349 = vmatpush1.bf16.msra.mxu0 0
        %350 = vmatprep.subr.bf16.mxu0 0
        %351 = vmatpush1.bf16.msra.mxu0 0
        %352 = vmatprep.subr.bf16.mxu0 0
        %353 = vmatpush1.bf16.msra.mxu0 0
        %354 = vmatprep.subr.bf16.mxu0 0
        %355 = vmatpush1.bf16.msra.mxu0 0
        %356 = vmatprep.subr.bf16.mxu0 0
        %357 = vmatpush1.bf16.msra.mxu0 0
        %358 = vmatprep.subr.bf16.mxu0 0
        %359 = vmatpush1.bf16.msra.mxu0 0
        %360 = vmatprep.subr.bf16.mxu0 0
        %361 = vmatpush1.bf16.msra.mxu0 0
        %362 = vmatprep.subr.bf16.mxu0 0
        %363 = vmatpush1.bf16.msra.mxu0 0
        %364 = vmatprep.subr.bf16.mxu0 0
        %365 = vmatpush1.bf16.msra.mxu0 0
        %366 = vmatprep.subr.bf16.mxu0 0
        %367 = vmatpush1.bf16.msra.mxu0 0
        %368 = vmatprep.subr.bf16.mxu0 0
        %369 = vmatpush1.bf16.msra.mxu0 0
        %370 = vmatprep.subr.bf16.mxu0 0
        %371 = vmatpush1.bf16.msra.mxu0 0
        %372 = vmatprep.subr.bf16.mxu0 0
        %373 = vmatpush1.bf16.msra.mxu0 0
        %374 = vmatprep.subr.bf16.mxu0 0
        %375 = vmatpush1.bf16.msra.mxu0 0
        %376 = vmatprep.mubr.bf16.mxu0 0
        %377 = vmatmul.mubr.bf16.gmra.mrb[0].mxu0 %v342
        %v378 = vpop.f32.mrb[0].mxu0
        %v379 = vadd.f32 %v326, %v378
        %v380 = vpop.f32.mrb[0].mxu0
        %v381 = vpop.f32.mrb[0].mxu0
        %v382 = vpop.f32.mrb[0].mxu0
        %383 = vdwg.mxu0
        %385 = vrot.lane.b32.xlu0 %v379, 120
        %v386 = vpop.permute.xlu0 %385
        %388 = vrot.lane.b32.xlu0 %v379, 112
        %v389 = vpop.permute.xlu0 %388
        %391 = vrot.lane.b32.xlu0 %v379, 104
        %v392 = vpop.permute.xlu0 %391
        %v394 = vpack.c.bf16 %v379, %v379
        %v395 = vpack.c.bf16 %v386, %v386
        %v396 = vpack.c.bf16 %v389, %v389
        %v397 = vpack.c.bf16 %v392, %v392
        %399 = vrot.lane.b32.xlu0 %v394, 96
        %v400 = vpop.permute.xlu0 %399
        %vm401 = vcmask 64512
        %v403 = vsel %vm401, %v394, 0
        %v406 = vsel %vm401, %v400, 0
        %408 = vmatprep.subr.bf16.mxu0 0
        %409 = vmatpush1.bf16.xpose.msra.mxu0 %v406
        %410 = vmatprep.subr.bf16.mxu0 0
        %411 = vmatpush1.bf16.xpose.msra.mxu0 0
        %412 = vmatprep.subr.bf16.mxu0 0
        %413 = vmatpush1.bf16.xpose.msra.mxu0 0
        %414 = vmatprep.subr.bf16.mxu0 0
        %415 = vmatpush1.bf16.xpose.msra.mxu0 0
        %416 = vmatprep.subr.bf16.mxu0 0
        %417 = vmatpush1.bf16.xpose.msra.mxu0 0
        %418 = vmatprep.subr.bf16.mxu0 0
        %419 = vmatpush1.bf16.xpose.msra.mxu0 0
        %420 = vmatprep.subr.bf16.mxu0 0
        %421 = vmatpush1.bf16.xpose.msra.mxu0 0
        %422 = vmatprep.subr.bf16.mxu0 0
        %423 = vmatpush1.bf16.xpose.msra.mxu0 0
        %424 = vmatprep.subr.bf16.mxu0 0
        %425 = vmatpush1.bf16.xpose.msra.mxu0 0
        %426 = vmatprep.subr.bf16.mxu0 0
        %427 = vmatpush1.bf16.xpose.msra.mxu0 0
        %428 = vmatprep.subr.bf16.mxu0 0
        %429 = vmatpush1.bf16.xpose.msra.mxu0 0
        %430 = vmatprep.subr.bf16.mxu0 0
        %431 = vmatpush1.bf16.xpose.msra.mxu0 0
        %432 = vmatprep.subr.bf16.mxu0 0
        %433 = vmatpush1.bf16.xpose.msra.mxu0 0
        %434 = vmatprep.subr.bf16.mxu0 0
        %435 = vmatpush1.bf16.xpose.msra.mxu0 0
        %436 = vmatprep.subr.bf16.mxu0 0
        %437 = vmatpush1.bf16.xpose.msra.mxu0 0
        %438 = vmatprep.subr.bf16.mxu0 0
        %439 = vmatpush1.bf16.xpose.msra.mxu0 0
        %440 = vmatprep.mubr.bf16.mxu0 0
        %441 = vmatmul.mubr.bf16.gmra.mrb[0].mxu0 %v403
        %v442 = vpop.f32.mrb[0].mxu0
        %v443 = vadd.f32 0.0, %v442
        %v444 = vpop.f32.mrb[0].mxu0
        %v445 = vpop.f32.mrb[0].mxu0
        %v446 = vpop.f32.mrb[0].mxu0
        %447 = vdwg.mxu0
        %449 = vrot.lane.b32.xlu0 %v395, 96
        %v450 = vpop.permute.xlu0 %449
        %v452 = vsel %vm401, %v395, 0
        %v455 = vsel %vm401, %v450, 0
        %457 = vmatprep.subr.bf16.mxu0 0
        %458 = vmatpush1.bf16.xpose.msra.mxu0 %v455
        %459 = vmatprep.subr.bf16.mxu0 0
        %460 = vmatpush1.bf16.xpose.msra.mxu0 0
        %461 = vmatprep.subr.bf16.mxu0 0
        %462 = vmatpush1.bf16.xpose.msra.mxu0 0
        %463 = vmatprep.subr.bf16.mxu0 0
        %464 = vmatpush1.bf16.xpose.msra.mxu0 0
        %465 = vmatprep.subr.bf16.mxu0 0
        %466 = vmatpush1.bf16.xpose.msra.mxu0 0
        %467 = vmatprep.subr.bf16.mxu0 0
        %468 = vmatpush1.bf16.xpose.msra.mxu0 0
        %469 = vmatprep.subr.bf16.mxu0 0
        %470 = vmatpush1.bf16.xpose.msra.mxu0 0
        %471 = vmatprep.subr.bf16.mxu0 0
        %472 = vmatpush1.bf16.xpose.msra.mxu0 0
        %473 = vmatprep.subr.bf16.mxu0 0
        %474 = vmatpush1.bf16.xpose.msra.mxu0 0
        %475 = vmatprep.subr.bf16.mxu0 0
        %476 = vmatpush1.bf16.xpose.msra.mxu0 0
        %477 = vmatprep.subr.bf16.mxu0 0
        %478 = vmatpush1.bf16.xpose.msra.mxu0 0
        %479 = vmatprep.subr.bf16.mxu0 0
        %480 = vmatpush1.bf16.xpose.msra.mxu0 0
        %481 = vmatprep.subr.bf16.mxu0 0
        %482 = vmatpush1.bf16.xpose.msra.mxu0 0
        %483 = vmatprep.subr.bf16.mxu0 0
        %484 = vmatpush1.bf16.xpose.msra.mxu0 0
        %485 = vmatprep.subr.bf16.mxu0 0
        %486 = vmatpush1.bf16.xpose.msra.mxu0 0
        %487 = vmatprep.subr.bf16.mxu0 0
        %488 = vmatpush1.bf16.xpose.msra.mxu0 0
        %489 = vmatprep.mubr.bf16.mxu0 0
        %490 = vmatmul.mubr.bf16.gmra.mrb[0].mxu0 %v452
        %v491 = vpop.f32.mrb[0].mxu0
        %v492 = vadd.f32 0.0, %v491
        %v493 = vpop.f32.mrb[0].mxu0
        %v494 = vpop.f32.mrb[0].mxu0
        %v495 = vpop.f32.mrb[0].mxu0
        %496 = vdwg.mxu0
        %498 = vrot.lane.b32.xlu0 %v396, 96
        %v499 = vpop.permute.xlu0 %498
        %v501 = vsel %vm401, %v396, 0
        %v504 = vsel %vm401, %v499, 0
        %506 = vmatprep.subr.bf16.mxu0 0
        %507 = vmatpush1.bf16.xpose.msra.mxu0 %v504
        %508 = vmatprep.subr.bf16.mxu0 0
        %509 = vmatpush1.bf16.xpose.msra.mxu0 0
        %510 = vmatprep.subr.bf16.mxu0 0
        %511 = vmatpush1.bf16.xpose.msra.mxu0 0
        %512 = vmatprep.subr.bf16.mxu0 0
        %513 = vmatpush1.bf16.xpose.msra.mxu0 0
        %514 = vmatprep.subr.bf16.mxu0 0
        %515 = vmatpush1.bf16.xpose.msra.mxu0 0
        %516 = vmatprep.subr.bf16.mxu0 0
        %517 = vmatpush1.bf16.xpose.msra.mxu0 0
        %518 = vmatprep.subr.bf16.mxu0 0
        %519 = vmatpush1.bf16.xpose.msra.mxu0 0
        %520 = vmatprep.subr.bf16.mxu0 0
        %521 = vmatpush1.bf16.xpose.msra.mxu0 0
        %522 = vmatprep.subr.bf16.mxu0 0
        %523 = vmatpush1.bf16.xpose.msra.mxu0 0
        %524 = vmatprep.subr.bf16.mxu0 0
        %525 = vmatpush1.bf16.xpose.msra.mxu0 0
        %526 = vmatprep.subr.bf16.mxu0 0
        %527 = vmatpush1.bf16.xpose.msra.mxu0 0
        %528 = vmatprep.subr.bf16.mxu0 0
        %529 = vmatpush1.bf16.xpose.msra.mxu0 0
        %530 = vmatprep.subr.bf16.mxu0 0
        %531 = vmatpush1.bf16.xpose.msra.mxu0 0
        %532 = vmatprep.subr.bf16.mxu0 0
        %533 = vmatpush1.bf16.xpose.msra.mxu0 0
        %534 = vmatprep.subr.bf16.mxu0 0
        %535 = vmatpush1.bf16.xpose.msra.mxu0 0
        %536 = vmatprep.subr.bf16.mxu0 0
        %537 = vmatpush1.bf16.xpose.msra.mxu0 0
        %538 = vmatprep.mubr.bf16.mxu0 0
        %539 = vmatmul.mubr.bf16.gmra.mrb[0].mxu0 %v501
        %v540 = vpop.f32.mrb[0].mxu0
        %v541 = vadd.f32 0.0, %v540
        %v542 = vpop.f32.mrb[0].mxu0
        %v543 = vpop.f32.mrb[0].mxu0
        %v544 = vpop.f32.mrb[0].mxu0
        %545 = vdwg.mxu0
        %547 = vrot.lane.b32.xlu0 %v397, 96
        %v548 = vpop.permute.xlu0 %547
        %v550 = vsel %vm401, %v397, 0
        %v553 = vsel %vm401, %v548, 0
        %555 = vmatprep.subr.bf16.mxu0 0
        %556 = vmatpush1.bf16.xpose.msra.mxu0 %v553
        %557 = vmatprep.subr.bf16.mxu0 0
        %558 = vmatpush1.bf16.xpose.msra.mxu0 0
        %559 = vmatprep.subr.bf16.mxu0 0
        %560 = vmatpush1.bf16.xpose.msra.mxu0 0
        %561 = vmatprep.subr.bf16.mxu0 0
        %562 = vmatpush1.bf16.xpose.msra.mxu0 0
        %563 = vmatprep.subr.bf16.mxu0 0
        %564 = vmatpush1.bf16.xpose.msra.mxu0 0
        %565 = vmatprep.subr.bf16.mxu0 0
        %566 = vmatpush1.bf16.xpose.msra.mxu0 0
        %567 = vmatprep.subr.bf16.mxu0 0
        %568 = vmatpush1.bf16.xpose.msra.mxu0 0
        %569 = vmatprep.subr.bf16.mxu0 0
        %570 = vmatpush1.bf16.xpose.msra.mxu0 0
        %571 = vmatprep.subr.bf16.mxu0 0
        %572 = vmatpush1.bf16.xpose.msra.mxu0 0
        %573 = vmatprep.subr.bf16.mxu0 0
        %574 = vmatpush1.bf16.xpose.msra.mxu0 0
        %575 = vmatprep.subr.bf16.mxu0 0
        %576 = vmatpush1.bf16.xpose.msra.mxu0 0
        %577 = vmatprep.subr.bf16.mxu0 0
        %578 = vmatpush1.bf16.xpose.msra.mxu0 0
        %579 = vmatprep.subr.bf16.mxu0 0
        %580 = vmatpush1.bf16.xpose.msra.mxu0 0
        %581 = vmatprep.subr.bf16.mxu0 0
        %582 = vmatpush1.bf16.xpose.msra.mxu0 0
        %583 = vmatprep.subr.bf16.mxu0 0
        %584 = vmatpush1.bf16.xpose.msra.mxu0 0
        %585 = vmatprep.subr.bf16.mxu0 0
        %586 = vmatpush1.bf16.xpose.msra.mxu0 0
        %587 = vmatprep.mubr.bf16.mxu0 0
        %588 = vmatmul.mubr.bf16.gmra.mrb[0].mxu0 %v550
        %v589 = vpop.f32.mrb[0].mxu0
        %v590 = vadd.f32 0.0, %v589
        %v591 = vpop.f32.mrb[0].mxu0
        %v592 = vpop.f32.mrb[0].mxu0
        %v593 = vpop.f32.mrb[0].mxu0
        %594 = vdwg.mxu0
        %v595 = vsel %vm401, %v443, -inf
        %596 = vmax.xlane.f32.xlu0 %v595
        %v597 = vpop.xlane.xlu0 %596
        %v598 = vsel %vm401, %v492, -inf
        %599 = vmax.xlane.f32.xlu0 %v598
        %v600 = vpop.xlane.xlu0 %599
        %v601 = vsel %vm401, %v541, -inf
        %602 = vmax.xlane.f32.xlu0 %v601
        %v603 = vpop.xlane.xlu0 %602
        %v604 = vsel %vm401, %v590, -inf
        %605 = vmax.xlane.f32.xlu0 %v604
        %v606 = vpop.xlane.xlu0 %605
        %v607 = vsub.f32 %v443, %v597
        %v608 = vsub.f32 %v492, %v600
        %v609 = vsub.f32 %v541, %v603
        %v610 = vsub.f32 %v590, %v606
        %v611 = vmul.f32 %v607, 1.442695
        %v612 = vpow.pop %v611
        %v613 = vmul.f32 %v608, 1.442695
        %v614 = vpow.pop %v613
        %v615 = vmul.f32 %v609, 1.442695
        %v616 = vpow.pop %v615
        %v617 = vmul.f32 %v610, 1.442695
        %v618 = vpow.pop %v617
        %v619 = vsel %vm401, %v612, 0.0
        %620 = vadd.xlane.f32.xlu0 %v619
        %v621 = vpop.xlane.xlu0 %620
        %v622 = vsel %vm401, %v614, 0.0
        %623 = vadd.xlane.f32.xlu0 %v622
        %v624 = vpop.xlane.xlu0 %623
        %v625 = vsel %vm401, %v616, 0.0
        %626 = vadd.xlane.f32.xlu0 %v625
        %v627 = vpop.xlane.xlu0 %626
        %v628 = vsel %vm401, %v618, 0.0
        %629 = vadd.xlane.f32.xlu0 %v628
        %v630 = vpop.xlane.xlu0 %629
        %v631 = vrcp.pop %v621
        %v632 = vmul.f32 %v612, %v631
        %v633 = vrcp.pop %v624
        %v634 = vmul.f32 %v614, %v633
        %v635 = vrcp.pop %v627
        %v636 = vmul.f32 %v616, %v635
        %v637 = vrcp.pop %v630
        %v638 = vmul.f32 %v618, %v637
        %v639 = vpack.c.bf16 %v632, %v632
        %v640 = vpack.c.bf16 %v634, %v634
        %v641 = vpack.c.bf16 %v636, %v636
        %v642 = vpack.c.bf16 %v638, %v638
        %643 = vrot.lane.b32.xlu0 %v394, 64
        %v644 = vpop.permute.xlu0 %643
        %v646 = vsel %vm401, %v639, 0
        %vm648 = vcmask 1043456
        %v650 = vsel %vm648, %v644, 0
        %652 = vmatprep.subr.bf16.mxu0 0
        %653 = vmatpush1.bf16.msra.mxu0 %v650
        %654 = vmatprep.subr.bf16.mxu0 0
        %655 = vmatpush1.bf16.msra.mxu0 0
        %656 = vmatprep.subr.bf16.mxu0 0
        %657 = vmatpush1.bf16.msra.mxu0 0
        %658 = vmatprep.subr.bf16.mxu0 0
        %659 = vmatpush1.bf16.msra.mxu0 0
        %660 = vmatprep.subr.bf16.mxu0 0
        %661 = vmatpush1.bf16.msra.mxu0 0
        %662 = vmatprep.subr.bf16.mxu0 0
        %663 = vmatpush1.bf16.msra.mxu0 0
        %664 = vmatprep.subr.bf16.mxu0 0
        %665 = vmatpush1.bf16.msra.mxu0 0
        %666 = vmatprep.subr.bf16.mxu0 0
        %667 = vmatpush1.bf16.msra.mxu0 0
        %668 = vmatprep.subr.bf16.mxu0 0
        %669 = vmatpush1.bf16.msra.mxu0 0
        %670 = vmatprep.subr.bf16.mxu0 0
        %671 = vmatpush1.bf16.msra.mxu0 0
        %672 = vmatprep.subr.bf16.mxu0 0
        %673 = vmatpush1.bf16.msra.mxu0 0
        %674 = vmatprep.subr.bf16.mxu0 0
        %675 = vmatpush1.bf16.msra.mxu0 0
        %676 = vmatprep.subr.bf16.mxu0 0
        %677 = vmatpush1.bf16.msra.mxu0 0
        %678 = vmatprep.subr.bf16.mxu0 0
        %679 = vmatpush1.bf16.msra.mxu0 0
        %680 = vmatprep.subr.bf16.mxu0 0
        %681 = vmatpush1.bf16.msra.mxu0 0
        %682 = vmatprep.subr.bf16.mxu0 0
        %683 = vmatpush1.bf16.msra.mxu0 0
        %684 = vmatprep.mubr.bf16.mxu0 0
        %685 = vmatmul.mubr.bf16.gmra.mrb[0].mxu0 %v646
        %v686 = vpop.f32.mrb[0].mxu0
        %v687 = vadd.f32 0.0, %v686
        %v688 = vpop.f32.mrb[0].mxu0
        %v689 = vpop.f32.mrb[0].mxu0
        %v690 = vpop.f32.mrb[0].mxu0
        %691 = vdwg.mxu0
        %692 = vrot.lane.b32.xlu0 %v395, 64
        %v693 = vpop.permute.xlu0 %692
        %v695 = vsel %vm401, %v640, 0
        %v698 = vsel %vm648, %v693, 0
        %700 = vmatprep.subr.bf16.mxu0 0
        %701 = vmatpush1.bf16.msra.mxu0 %v698
        %702 = vmatprep.subr.bf16.mxu0 0
        %703 = vmatpush1.bf16.msra.mxu0 0
        %704 = vmatprep.subr.bf16.mxu0 0
        %705 = vmatpush1.bf16.msra.mxu0 0
        %706 = vmatprep.subr.bf16.mxu0 0
        %707 = vmatpush1.bf16.msra.mxu0 0
        %708 = vmatprep.subr.bf16.mxu0 0
        %709 = vmatpush1.bf16.msra.mxu0 0
        %710 = vmatprep.subr.bf16.mxu0 0
        %711 = vmatpush1.bf16.msra.mxu0 0
        %712 = vmatprep.subr.bf16.mxu0 0
        %713 = vmatpush1.bf16.msra.mxu0 0
        %714 = vmatprep.subr.bf16.mxu0 0
        %715 = vmatpush1.bf16.msra.mxu0 0
        %716 = vmatprep.subr.bf16.mxu0 0
        %717 = vmatpush1.bf16.msra.mxu0 0
        %718 = vmatprep.subr.bf16.mxu0 0
        %719 = vmatpush1.bf16.msra.mxu0 0
        %720 = vmatprep.subr.bf16.mxu0 0
        %721 = vmatpush1.bf16.msra.mxu0 0
        %722 = vmatprep.subr.bf16.mxu0 0
        %723 = vmatpush1.bf16.msra.mxu0 0
        %724 = vmatprep.subr.bf16.mxu0 0
        %725 = vmatpush1.bf16.msra.mxu0 0
        %726 = vmatprep.subr.bf16.mxu0 0
        %727 = vmatpush1.bf16.msra.mxu0 0
        %728 = vmatprep.subr.bf16.mxu0 0
        %729 = vmatpush1.bf16.msra.mxu0 0
        %730 = vmatprep.subr.bf16.mxu0 0
        %731 = vmatpush1.bf16.msra.mxu0 0
        %732 = vmatprep.mubr.bf16.mxu0 0
        %733 = vmatmul.mubr.bf16.gmra.mrb[0].mxu0 %v695
        %v734 = vpop.f32.mrb[0].mxu0
        %v735 = vadd.f32 0.0, %v734
        %v736 = vpop.f32.mrb[0].mxu0
        %v737 = vpop.f32.mrb[0].mxu0
        %v738 = vpop.f32.mrb[0].mxu0
        %739 = vdwg.mxu0
        %740 = vrot.lane.b32.xlu0 %v396, 64
        %v741 = vpop.permute.xlu0 %740
        %v743 = vsel %vm401, %v641, 0
        %v746 = vsel %vm648, %v741, 0
        %748 = vmatprep.subr.bf16.mxu0 0
        %749 = vmatpush1.bf16.msra.mxu0 %v746
        %750 = vmatprep.subr.bf16.mxu0 0
        %751 = vmatpush1.bf16.msra.mxu0 0
        %752 = vmatprep.subr.bf16.mxu0 0
        %753 = vmatpush1.bf16.msra.mxu0 0
        %754 = vmatprep.subr.bf16.mxu0 0
        %755 = vmatpush1.bf16.msra.mxu0 0
        %756 = vmatprep.subr.bf16.mxu0 0
        %757 = vmatpush1.bf16.msra.mxu0 0
        %758 = vmatprep.subr.bf16.mxu0 0
        %759 = vmatpush1.bf16.msra.mxu0 0
        %760 = vmatprep.subr.bf16.mxu0 0
        %761 = vmatpush1.bf16.msra.mxu0 0
        %762 = vmatprep.subr.bf16.mxu0 0
        %763 = vmatpush1.bf16.msra.mxu0 0
        %764 = vmatprep.subr.bf16.mxu0 0
        %765 = vmatpush1.bf16.msra.mxu0 0
        %766 = vmatprep.subr.bf16.mxu0 0
        %767 = vmatpush1.bf16.msra.mxu0 0
        %768 = vmatprep.subr.bf16.mxu0 0
        %769 = vmatpush1.bf16.msra.mxu0 0
        %770 = vmatprep.subr.bf16.mxu0 0
        %771 = vmatpush1.bf16.msra.mxu0 0
        %772 = vmatprep.subr.bf16.mxu0 0
        %773 = vmatpush1.bf16.msra.mxu0 0
        %774 = vmatprep.subr.bf16.mxu0 0
        %775 = vmatpush1.bf16.msra.mxu0 0
        %776 = vmatprep.subr.bf16.mxu0 0
        %777 = vmatpush1.bf16.msra.mxu0 0
        %778 = vmatprep.subr.bf16.mxu0 0
        %779 = vmatpush1.bf16.msra.mxu0 0
        %780 = vmatprep.mubr.bf16.mxu0 0
        %781 = vmatmul.mubr.bf16.gmra.mrb[0].mxu0 %v743
        %v782 = vpop.f32.mrb[0].mxu0
        %v783 = vadd.f32 0.0, %v782
        %v784 = vpop.f32.mrb[0].mxu0
        %v785 = vpop.f32.mrb[0].mxu0
        %v786 = vpop.f32.mrb[0].mxu0
        %787 = vdwg.mxu0
        %788 = vrot.lane.b32.xlu0 %v397, 64
        %v789 = vpop.permute.xlu0 %788
        %v791 = vsel %vm401, %v642, 0
        %v794 = vsel %vm648, %v789, 0
        %796 = vmatprep.subr.bf16.mxu0 0
        %797 = vmatpush1.bf16.msra.mxu0 %v794
        %798 = vmatprep.subr.bf16.mxu0 0
        %799 = vmatpush1.bf16.msra.mxu0 0
        %800 = vmatprep.subr.bf16.mxu0 0
        %801 = vmatpush1.bf16.msra.mxu0 0
        %802 = vmatprep.subr.bf16.mxu0 0
        %803 = vmatpush1.bf16.msra.mxu0 0
        %804 = vmatprep.subr.bf16.mxu0 0
        %805 = vmatpush1.bf16.msra.mxu0 0
        %806 = vmatprep.subr.bf16.mxu0 0
        %807 = vmatpush1.bf16.msra.mxu0 0
        %808 = vmatprep.subr.bf16.mxu0 0
        %809 = vmatpush1.bf16.msra.mxu0 0
        %810 = vmatprep.subr.bf16.mxu0 0
        %811 = vmatpush1.bf16.msra.mxu0 0
        %812 = vmatprep.subr.bf16.mxu0 0
        %813 = vmatpush1.bf16.msra.mxu0 0
        %814 = vmatprep.subr.bf16.mxu0 0
        %815 = vmatpush1.bf16.msra.mxu0 0
        %816 = vmatprep.subr.bf16.mxu0 0
        %817 = vmatpush1.bf16.msra.mxu0 0
        %818 = vmatprep.subr.bf16.mxu0 0
        %819 = vmatpush1.bf16.msra.mxu0 0
        %820 = vmatprep.subr.bf16.mxu0 0
        %821 = vmatpush1.bf16.msra.mxu0 0
        %822 = vmatprep.subr.bf16.mxu0 0
        %823 = vmatpush1.bf16.msra.mxu0 0
        %824 = vmatprep.subr.bf16.mxu0 0
        %825 = vmatpush1.bf16.msra.mxu0 0
        %826 = vmatprep.subr.bf16.mxu0 0
        %827 = vmatpush1.bf16.msra.mxu0 0
        %828 = vmatprep.mubr.bf16.mxu0 0
        %829 = vmatmul.mubr.bf16.gmra.mrb[0].mxu0 %v791
        %v830 = vpop.f32.mrb[0].mxu0
        %v831 = vadd.f32 0.0, %v830
        %v832 = vpop.f32.mrb[0].mxu0
        %v833 = vpop.f32.mrb[0].mxu0
        %v834 = vpop.f32.mrb[0].mxu0
        %835 = vdwg.mxu0
        %837 = vrot.lane.b32.xlu0 %v735, 8
        %v838 = vpop.permute.xlu0 %837
        %841 = vrot.lane.b32.xlu0 %v783, 16
        %v842 = vpop.permute.xlu0 %841
        %845 = vrot.lane.b32.xlu0 %v831, 24
        %v846 = vpop.permute.xlu0 %845
        %v848 = vsel %vm401, %v687, %v838
        %vm849 = vcmask 130048
        %v850 = vsel %vm849, %v848, %v842
        %vm851 = vcmask 195584
        %v852 = vsel %vm851, %v850, %v846
        %v853 = vpack.c.bf16 %v852, %v852
        %v854 = vld [vmem:[%s3] sm:$0xf]
        %v855 = vld [vmem:[%s3 + $0x4] sm:$0xf]
        %v856 = vld [vmem:[%s3 + $0x8] sm:$0xf]
        %v857 = vld [vmem:[%s3 + $0xc] sm:$0xf]
        %v858 = vlaneseq
        %v859 = vshrl.u32 %v858, 7
        %v860 = vsub.s32 0, %v859
        %v861 = vrot.slane %v311, %v860
        %v866 = vunpack.c.l.b16 %v854
        %v867 = vunpack.c.l.b16 %v855
        %v868 = vunpack.c.l.b16 %v856
        %v869 = vunpack.c.l.b16 %v857
        %v870 = vpack.c.b16 %v867, %v866
        %v871 = vpack.c.b16 %v869, %v868
        %v875 = vsel %vm340, %v853, 0
        %877 = vmatprep.subr.bf16.mxu0 0
        %878 = vmatpush1.bf16.msra.mxu0 %v870
        %879 = vmatprep.subr.bf16.mxu0 0
        %880 = vmatpush1.bf16.msra.mxu0 %v871
        %881 = vmatprep.subr.bf16.mxu0 0
        %882 = vmatpush1.bf16.msra.mxu0 0
        %883 = vmatprep.subr.bf16.mxu0 0
        %884 = vmatpush1.bf16.msra.mxu0 0
        %885 = vmatprep.subr.bf16.mxu0 0
        %886 = vmatpush1.bf16.msra.mxu0 0
        %887 = vmatprep.subr.bf16.mxu0 0
        %888 = vmatpush1.bf16.msra.mxu0 0
        %889 = vmatprep.subr.bf16.mxu0 0
        %890 = vmatpush1.bf16.msra.mxu0 0
        %891 = vmatprep.subr.bf16.mxu0 0
        %892 = vmatpush1.bf16.msra.mxu0 0
        %893 = vmatprep.subr.bf16.mxu0 0
        %894 = vmatpush1.bf16.msra.mxu0 0
        %895 = vmatprep.subr.bf16.mxu0 0
        %896 = vmatpush1.bf16.msra.mxu0 0
        %897 = vmatprep.subr.bf16.mxu0 0
        %898 = vmatpush1.bf16.msra.mxu0 0
        %899 = vmatprep.subr.bf16.mxu0 0
        %900 = vmatpush1.bf16.msra.mxu0 0
        %901 = vmatprep.subr.bf16.mxu0 0
        %902 = vmatpush1.bf16.msra.mxu0 0
        %903 = vmatprep.subr.bf16.mxu0 0
        %904 = vmatpush1.bf16.msra.mxu0 0
        %905 = vmatprep.subr.bf16.mxu0 0
        %906 = vmatpush1.bf16.msra.mxu0 0
        %907 = vmatprep.subr.bf16.mxu0 0
        %908 = vmatpush1.bf16.msra.mxu0 0
        %909 = vmatprep.mubr.bf16.mxu0 0
        %910 = vmatmul.mubr.bf16.gmra.mrb[0].mxu0 %v875
        %v911 = vpop.f32.mrb[0].mxu0
        %v912 = vadd.f32 %v861, %v911
        %v913 = vpop.f32.mrb[0].mxu0
        %v914 = vpop.f32.mrb[0].mxu0
        %v915 = vpop.f32.mrb[0].mxu0
        %916 = vdwg.mxu0
        %v917 = vadd.f32 %v309, %v912
        %v918 = vsel %vm340, %v917, 0.0
        %919 = vadd.xlane.f32.xlu0 %v918
        %v920 = vpop.xlane.xlu0 %919
        %v921 = vrcp.pop 32.0
        %v922 = vmul.f32 %v920, %v921
        %v923 = vsub.f32 %v917, %v922
        %v924 = vmul.f32 %v923, %v923
        %v925 = vsel %vm340, %v924, 0.0
        %926 = vadd.xlane.f32.xlu0 %v925
        %v927 = vpop.xlane.xlu0 %926
        %v928 = vmul.f32 %v927, %v921
        %v929 = vadd.f32 %v928, 1e-05
        %v930 = vrsqrt.pop %v929
        %v931 = vmul.f32 %v923, %v930
        %v932 = vlaneseq
        %v933 = vshrl.u32 %v932, 7
        %v934 = vsub.s32 0, %v933
        %v935 = vrot.slane %v313, %v934
        %v936 = vmul.f32 %v931, %v935
        %v937 = vlaneseq
        %v938 = vshrl.u32 %v937, 7
        %v939 = vsub.s32 0, %v938
        %v940 = vrot.slane %v314, %v939
        %v941 = vadd.f32 %v936, %v940
        %v942 = vpack.c.bf16 %v941, %v941
        %v943 = vld [vmem:[%s4] sm:$0xf]
        %v944 = vld [vmem:[%s4 + $0x4] sm:$0xf]
        %v945 = vld [vmem:[%s4 + $0x8] sm:$0xf]
        %v946 = vld [vmem:[%s4 + $0xc] sm:$0xf]
        %v947 = vlaneseq
        %v948 = vshrl.u32 %v947, 7
        %v949 = vsub.s32 0, %v948
        %v950 = vrot.slane %v310, %v949
        %v955 = vunpack.c.l.b16 %v943
        %v956 = vunpack.c.l.b16 %v944
        %v957 = vunpack.c.l.b16 %v945
        %v958 = vunpack.c.l.b16 %v946
        %v959 = vpack.c.b16 %v956, %v955
        %v960 = vpack.c.b16 %v958, %v957
        %v964 = vsel %vm340, %v942, 0
        %966 = vmatprep.subr.bf16.mxu0 0
        %967 = vmatpush1.bf16.msra.mxu0 %v959
        %968 = vmatprep.subr.bf16.mxu0 0
        %969 = vmatpush1.bf16.msra.mxu0 %v960
        %970 = vmatprep.subr.bf16.mxu0 0
        %971 = vmatpush1.bf16.msra.mxu0 0
        %972 = vmatprep.subr.bf16.mxu0 0
        %973 = vmatpush1.bf16.msra.mxu0 0
        %974 = vmatprep.subr.bf16.mxu0 0
        %975 = vmatpush1.bf16.msra.mxu0 0
        %976 = vmatprep.subr.bf16.mxu0 0
        %977 = vmatpush1.bf16.msra.mxu0 0
        %978 = vmatprep.subr.bf16.mxu0 0
        %979 = vmatpush1.bf16.msra.mxu0 0
        %980 = vmatprep.subr.bf16.mxu0 0
        %981 = vmatpush1.bf16.msra.mxu0 0
        %982 = vmatprep.subr.bf16.mxu0 0
        %983 = vmatpush1.bf16.msra.mxu0 0
        %984 = vmatprep.subr.bf16.mxu0 0
        %985 = vmatpush1.bf16.msra.mxu0 0
        %986 = vmatprep.subr.bf16.mxu0 0
        %987 = vmatpush1.bf16.msra.mxu0 0
        %988 = vmatprep.subr.bf16.mxu0 0
        %989 = vmatpush1.bf16.msra.mxu0 0
        %990 = vmatprep.subr.bf16.mxu0 0
        %991 = vmatpush1.bf16.msra.mxu0 0
        %992 = vmatprep.subr.bf16.mxu0 0
        %993 = vmatpush1.bf16.msra.mxu0 0
        %994 = vmatprep.subr.bf16.mxu0 0
        %995 = vmatpush1.bf16.msra.mxu0 0
        %996 = vmatprep.subr.bf16.mxu0 0
        %997 = vmatpush1.bf16.msra.mxu0 0
        %998 = vmatprep.mubr.bf16.mxu0 0
        %999 = vmatmul.mubr.bf16.gmra.mrb[0].mxu0 %v964
        %v1000 = vpop.f32.mrb[0].mxu0
        %v1001 = vadd.f32 %v950, %v1000
        %v1002 = vpop.f32.mrb[0].mxu0
        %v1003 = vpop.f32.mrb[0].mxu0
        %v1004 = vpop.f32.mrb[0].mxu0
        %1005 = vdwg.mxu0
        %v1006 = vmax.f32 %v1001, 0.0
        %v1007 = vpack.c.bf16 %v1006, %v1006
        %v1008 = vld [vmem:[%s5] sm:$0xf]
        %v1009 = vld [vmem:[%s5 + $0x4] sm:$0xf]
        %v1010 = vld [vmem:[%s5 + $0x8] sm:$0xf]
        %v1011 = vld [vmem:[%s5 + $0xc] sm:$0xf]
        %v1012 = vld [vmem:[%s5 + $0x10] sm:$0xf]
        %v1013 = vld [vmem:[%s5 + $0x14] sm:$0xf]
        %v1014 = vld [vmem:[%s5 + $0x18] sm:$0xf]
        %v1015 = vld [vmem:[%s5 + $0x1c] sm:$0xf]
        %v1016 = vlaneseq
        %v1017 = vshrl.u32 %v1016, 7
        %v1018 = vsub.s32 0, %v1017
        %v1019 = vrot.slane %v312, %v1018
        %v1028 = vunpack.c.l.b16 %v1008
        %v1029 = vunpack.c.l.b16 %v1009
        %v1030 = vunpack.c.l.b16 %v1010
        %v1031 = vunpack.c.l.b16 %v1011
        %v1032 = vunpack.c.l.b16 %v1012
        %v1033 = vunpack.c.l.b16 %v1013
        %v1034 = vunpack.c.l.b16 %v1014
        %v1035 = vunpack.c.l.b16 %v1015
        %v1036 = vpack.c.b16 %v1029, %v1028
        %v1037 = vpack.c.b16 %v1031, %v1030
        %v1038 = vpack.c.b16 %v1033, %v1032
        %v1039 = vpack.c.b16 %v1035, %v1034
        %vm1044 = vcmask 523264
        %v1046 = vsel %vm1044, %v1007, 0
        %1048 = vmatprep.subr.bf16.mxu0 0
        %1049 = vmatpush1.bf16.msra.mxu0 %v1036
        %1050 = vmatprep.subr.bf16.mxu0 0
        %1051 = vmatpush1.bf16.msra.mxu0 %v1037
        %1052 = vmatprep.subr.bf16.mxu0 0
        %1053 = vmatpush1.bf16.msra.mxu0 %v1038
        %1054 = vmatprep.subr.bf16.mxu0 0
        %1055 = vmatpush1.bf16.msra.mxu0 %v1039
        %1056 = vmatprep.subr.bf16.mxu0 0
        %1057 = vmatpush1.bf16.msra.mxu0 0
        %1058 = vmatprep.subr.bf16.mxu0 0
        %1059 = vmatpush1.bf16.msra.mxu0 0
        %1060 = vmatprep.subr.bf16.mxu0 0
        %1061 = vmatpush1.bf16.msra.mxu0 0
        %1062 = vmatprep.subr.bf16.mxu0 0
        %1063 = vmatpush1.bf16.msra.mxu0 0
        %1064 = vmatprep.subr.bf16.mxu0 0
        %1065 = vmatpush1.bf16.msra.mxu0 0
        %1066 = vmatprep.subr.bf16.mxu0 0
        %1067 = vmatpush1.bf16.msra.mxu0 0
        %1068 = vmatprep.subr.bf16.mxu0 0
        %1069 = vmatpush1.bf16.msra.mxu0 0
        %1070 = vmatprep.subr.bf16.mxu0 0
        %1071 = vmatpush1.bf16.msra.mxu0 0
        %1072 = vmatprep.subr.bf16.mxu0 0
        %1073 = vmatpush1.bf16.msra.mxu0 0
        %1074 = vmatprep.subr.bf16.mxu0 0
        %1075 = vmatpush1.bf16.msra.mxu0 0
        %1076 = vmatprep.subr.bf16.mxu0 0
        %1077 = vmatpush1.bf16.msra.mxu0 0
        %1078 = vmatprep.subr.bf16.mxu0 0
        %1079 = vmatpush1.bf16.msra.mxu0 0
        %1080 = vmatprep.mubr.bf16.mxu0 0
        %1081 = vmatmul.mubr.bf16.gmra.mrb[0].mxu0 %v1046
        %v1082 = vpop.f32.mrb[0].mxu0
        %v1083 = vadd.f32 %v1019, %v1082
        %v1084 = vpop.f32.mrb[0].mxu0
        %v1085 = vpop.f32.mrb[0].mxu0
        %v1086 = vpop.f32.mrb[0].mxu0
        %1087 = vdwg.mxu0
        %v1088 = vadd.f32 %v941, %v1083
        %v1089 = vsel %vm340, %v1088, 0.0
        %1090 = vadd.xlane.f32.xlu0 %v1089
        %v1091 = vpop.xlane.xlu0 %1090
        %v1092 = vmul.f32 %v1091, %v921
        %v1093 = vsub.f32 %v1088, %v1092
        %v1094 = vmul.f32 %v1093, %v1093
        %v1095 = vsel %vm340, %v1094, 0.0
        %1096 = vadd.xlane.f32.xlu0 %v1095
        %v1097 = vpop.xlane.xlu0 %1096
        %v1098 = vmul.f32 %v1097, %v921
        %v1099 = vadd.f32 %v1098, 1e-05
        %v1100 = vrsqrt.pop %v1099
        %v1101 = vmul.f32 %v1093, %v1100
        %v1102 = vlaneseq
        %v1103 = vshrl.u32 %v1102, 7
        %v1104 = vsub.s32 0, %v1103
        %v1105 = vrot.slane %v315, %v1104
        %v1106 = vmul.f32 %v1101, %v1105
        %v1107 = vlaneseq
        %v1108 = vshrl.u32 %v1107, 7
        %v1109 = vsub.s32 0, %v1108
        %v1110 = vrot.slane %v316, %v1109
        %v1111 = vadd.f32 %v1106, %v1110
        %1112 = vst.msk [vmem:[%s306] sm:$0xff] %vm340, %v1111
        %s1113 = sand.u32 %s185, 1
        %s1114 = scalar_lea.sflag [#allocation4], %s1113
        %s1115 = sand.u32 %s185, 1
        %s1116 = smul.addr %s1115, 8
        %s1117 = scalar_lea.vmem [#allocation7], %s1116
        // Predicated region
        $region57: #{tpu_custom_call.1} parent=47 // pred_check
          %p1118 = pneg %p195
        $region58: #{tpu_custom_call.1} parent=47 // pred_check_branch
          %1120 = sbr.rel (%p1118) target = $region60
        $region59: #{tpu_custom_call.1} parent=47 // pred_region
          %s1122 = ssub.s32 128, 128
          %1123 = vsyncadd %s1114, %s1122
          %s1124 = smul.addr %s25, 128
          %s1125 = scalar_lea.hbm %s7, %s1124
          %s1127 = sshll.u32 %s1117, 4
          %s1128 = int_to_ptr.vmem [resolvable:$true] %s1127
          %1130 = dma.vmem_to_hbm [thread:$0]  %s1128, 128, %s1125, %s1114
        $region60: #{tpu_custom_call.1} parent=47 // pred_fallthru
          _
      $region48: #{tpu_custom_call.1} parent=5 // pred_fallthru
        _
      %p1131 = scmp.le.s32.totalorder 2, %s20
      // Predicated region
      $region61: #{tpu_custom_call.1} parent=5 // pred_check
        %p1132 = pneg %p1131
      $region62: #{tpu_custom_call.1} parent=5 // pred_check_branch
        %1134 = sbr.rel (%p1132) target = $region64
      $region63: #{tpu_custom_call.1} parent=5 // pred_region
        %s1135 = ssub.s32 %s20, 2
        // Predicated region
        $region65: #{tpu_custom_call.1} parent=63 // pred_check
          %p1136 = pneg %p201
        $region66: #{tpu_custom_call.1} parent=63 // pred_check_branch
          %1138 = sbr.rel (%p1136) target = $region68
        $region67: #{tpu_custom_call.1} parent=63 // pred_region
          %s1139 = sand.u32 %s186, 1
          %s1140 = scalar_lea.sflag [#allocation4], %s1139
          %s1141 = sand.u32 %s186, 1
          %s1142 = smul.addr %s1141, 8
          %s1143 = scalar_lea.vmem [#allocation7], %s1142
          %1144 = dma.done %s1140, 128
        $region68: #{tpu_custom_call.1} parent=63 // pred_fallthru
          _
      $region64: #{tpu_custom_call.1} parent=5 // pred_fallthru
        _
    $region6: #{tpu_custom_call.1} parent=1 // loop_footer
      %s24 = sadd.s32 1, %s20
    $region7: #{tpu_custom_call.1} parent=1 // loop_footer_branch
      %19 = sbr.rel target = $region3
    $region8: #{tpu_custom_call.1} parent=1 // loop_exit
      _
    %1145 = vsyncpa [#allocation3], 1
    %s1146 = scalar_lea.sflag [#allocation3], 1
    %1147 = vsyncpa %s1146, 1
    %1148 = vsyncpa [#allocation6], 1
    %1149 = vsyncpa [#allocation4], 1
    %s1150 = scalar_lea.sflag [#allocation4], 1
    %1151 = vsyncpa %s1150, 1

</llo_original>
